<compile_context>
chip_gen: v7x
topology: tpu7x:2x2x1
jax: 0.10.0
libtpu: 0.0.40
codegen_flags: <defaults>
</compile_context>

<pallas_src>
import jax
import jax.numpy as jnp
from jax.experimental import pallas as pl
from jax.experimental.pallas import tpu as pltpu


def mlp_kernel(x_ref, w1_ref, b1_ref, w2_ref, b2_ref, w3_ref, b3_ref, o_ref):
    # x_ref: [tile, 16] f32 (batch on sublanes); w{i}_ref: [in, out] bf16;
    # b{i}_ref: [1, out] f32; o_ref: [tile, 8] bf16.
    x = x_ref[...].astype(jnp.bfloat16)            # in-kernel cast; MXU eats bf16

    # in_proj + in_act (relu)
    h = jnp.dot(x, w1_ref[...], preferred_element_type=jnp.float32) + b1_ref[...]
    h = jnp.maximum(h, 0.0)

    # hidden_0 + hidden_out act (relu)
    h = jnp.dot(h.astype(jnp.bfloat16), w2_ref[...],
                preferred_element_type=jnp.float32) + b2_ref[...]
    h = jnp.maximum(h, 0.0)

    # out_proj + out_act (sigmoid) -- f32 math, bf16 store
    logits = jnp.dot(h.astype(jnp.bfloat16), w3_ref[...],
                     preferred_element_type=jnp.float32) + b3_ref[...]
    o_ref[...] = jax.nn.sigmoid(logits).astype(o_ref.dtype)


def _pick_batch_tile(batch, batch_tile):
    # Aim for >= 2 grid steps whenever the batch allows it (v7x has 2 TCs and
    # "parallel" shards the batch axis across them); tile is a multiple of 8
    # (sublane granularity) and capped at batch_tile (itself a multiple of 256).
    half = pl.cdiv(batch, 2)
    tile = 8 * pl.cdiv(half, 8)
    return max(8, min(batch_tile, tile))


def mlp_forward(x, params, *, batch_tile=2048, out_dtype=jnp.bfloat16):
    """x: [B, input_size] float32. params: prepared dict (bf16 weights [in, out],
    f32 biases [1, out]). Returns [B, output_size] in `out_dtype`."""
    B, F = x.shape
    w1, b1 = params["w1"], params["b1"]
    w2, b2 = params["w2"], params["b2"]
    w3, b3 = params["w3"], params["b3"]
    h1, h2, out_size = w1.shape[1], w2.shape[1], w3.shape[1]

    tile = _pick_batch_tile(B, batch_tile)
    grid = (pl.cdiv(B, tile),)            # last block padded/masked by Pallas

    def batch_map(i):
        return (i, 0)

    def const_map(i):
        return (0, 0)

    def resident(a):
        # Whole array, same block every step -> fetched once, stays in VMEM.
        return pl.BlockSpec(a.shape, const_map)

    weight_bytes = sum(int(a.size) * a.dtype.itemsize
                       for a in (w1, b1, w2, b2, w3, b3))
    cost = pl.CostEstimate(
        flops=2 * B * (F * h1 + h1 * h2 + h2 * out_size),
        transcendentals=B * out_size,                       # sigmoid
        bytes_accessed=(B * F * x.dtype.itemsize
                        + B * out_size * jnp.dtype(out_dtype).itemsize
                        + weight_bytes),
    )

    return pl.pallas_call(
        mlp_kernel,
        out_shape=jax.ShapeDtypeStruct((B, out_size), out_dtype),
        grid=grid,
        in_specs=[
            pl.BlockSpec((tile, F), batch_map),   # batch on sublanes, no wrapper transpose
            resident(w1), resident(b1),
            resident(w2), resident(b2),
            resident(w3), resident(b3),
        ],
        out_specs=pl.BlockSpec((tile, out_size), batch_map),
        compiler_params=pltpu.CompilerParams(
            dimension_semantics=("parallel",),    # batch axis shards across TCs (v7x)
        ),
        cost_estimate=cost,
    )(x, w1, b1, w2, b2, w3, b3)


def init_params(key, input_size, arch, output_size):
    """Deterministic synthetic init (uniform ~ PyTorch default scale), f32."""
    dims = [(input_size, arch[0]), (arch[0], arch[1]), (arch[1], output_size)]
    params = {}
    for idx, (fan_in, fan_out) in enumerate(dims, start=1):
        key, kw, kb = jax.random.split(key, 3)
        bound = 1.0 / (fan_in ** 0.5)
        params[f"w{idx}"] = jax.random.uniform(
            kw, (fan_in, fan_out), jnp.float32, minval=-bound, maxval=bound)
        params[f"b{idx}"] = jax.random.uniform(
            kb, (1, fan_out), jnp.float32, minval=-bound, maxval=bound)
    return params


def prepare_params(params_f32):
    """One-time setup: bf16 MXU weights [in, out], f32 biases [1, out]."""
    out = {}
    for idx in (1, 2, 3):
        out[f"w{idx}"] = params_f32[f"w{idx}"].astype(jnp.bfloat16)
        out[f"b{idx}"] = params_f32[f"b{idx}"].reshape(1, -1).astype(jnp.float32)
    return out


def mlp_reference(x, params):
    h = jnp.maximum(x @ params["w1"] + params["b1"], 0.0)
    h = jnp.maximum(h @ params["w2"] + params["b2"], 0.0)
    return jax.nn.sigmoid(h @ params["w3"] + params["b3"])


if __name__ == "__main__":
    input_size, output_size = 16, 8
    arch = [32, 32]
    batch = 777   # not a tile multiple: exercises masked last block + 2-step grid

    key = jax.random.PRNGKey(0)
    key, kx = jax.random.split(key)
    x = jax.random.normal(kx, (batch, input_size), dtype=jnp.float32)
    params_f32 = init_params(key, input_size, arch, output_size)
    params = prepare_params(params_f32)   # one-time cast, not per call

    out = jax.block_until_ready(mlp_forward(x, params))

    ref = mlp_reference(x, params_f32)
    assert out.shape == (batch, output_size)
    assert out.dtype == jnp.bfloat16
    # bf16 MXU inputs + bf16 output store -> relaxed tolerance vs f32 reference.
    assert jnp.allclose(out.astype(jnp.float32), ref, atol=2e-2, rtol=2e-2), \
        "mismatch vs pure-JAX reference"

    print("KERNEL_OK")
</pallas_src>

<mosaic_0001>
module attributes {stable_mosaic.version = 11 : i64} {
  func.func @mlp_kernel(%arg0: i32, %arg1: memref<392x16xf32, #tpu.memory_space<vmem>>, %arg2: memref<16x32xbf16, #tpu.memory_space<vmem>>, %arg3: memref<1x32xf32, #tpu.memory_space<vmem>>, %arg4: memref<32x32xbf16, #tpu.memory_space<vmem>>, %arg5: memref<1x32xf32, #tpu.memory_space<vmem>>, %arg6: memref<32x8xbf16, #tpu.memory_space<vmem>>, %arg7: memref<1x8xf32, #tpu.memory_space<vmem>>, %arg8: memref<392x8xbf16, #tpu.memory_space<vmem>>) attributes {dimension_semantics = [#tpu.dimension_semantics<parallel>], iteration_bounds = array<i64: 2>, scalar_prefetch = 0 : i64, scratch_operands = 0 : i64, tpu.core_type = #tpu.core_type<tc>, window_params = [{transform_indices = @transform_0, window_bounds = array<i64: 392, 16>}, {pipeline_mode = #tpu.pipeline_mode<synchronous>, transform_indices = @transform_1, window_bounds = array<i64: 16, 32>}, {pipeline_mode = #tpu.pipeline_mode<synchronous>, transform_indices = @transform_2, window_bounds = array<i64: 1, 32>}, {pipeline_mode = #tpu.pipeline_mode<synchronous>, transform_indices = @transform_3, window_bounds = array<i64: 32, 32>}, {pipeline_mode = #tpu.pipeline_mode<synchronous>, transform_indices = @transform_4, window_bounds = array<i64: 1, 32>}, {pipeline_mode = #tpu.pipeline_mode<synchronous>, transform_indices = @transform_5, window_bounds = array<i64: 32, 8>}, {pipeline_mode = #tpu.pipeline_mode<synchronous>, transform_indices = @transform_6, window_bounds = array<i64: 1, 8>}, {transform_indices = @transform_7, window_bounds = array<i64: 392, 8>}]} {
    %c0 = arith.constant 0 : index
    %c0_0 = arith.constant 0 : index
    %0 = vector.load %arg1[%c0, %c0_0] : memref<392x16xf32, #tpu.memory_space<vmem>>, vector<392x16xf32>
    %1 = arith.truncf %0 : vector<392x16xf32> to vector<392x16xbf16>
    %c0_1 = arith.constant 0 : index
    %c0_2 = arith.constant 0 : index
    %2 = vector.load %arg2[%c0_1, %c0_2] : memref<16x32xbf16, #tpu.memory_space<vmem>>, vector<16x32xbf16>
    %cst = arith.constant dense<0.000000e+00> : vector<392x32xf32>
    %3 = tpu.matmul %1, %2, %cst {dimension_numbers = #tpu.dot_dimension_numbers<[1], [0], [0], [1], [0, 0, 1, 1], [], []>} : vector<392x16xbf16>, vector<16x32xbf16>, vector<392x32xf32> -> vector<392x32xf32>
    %c0_3 = arith.constant 0 : index
    %c0_4 = arith.constant 0 : index
    %4 = vector.load %arg3[%c0_3, %c0_4] : memref<1x32xf32, #tpu.memory_space<vmem>>, vector<1x32xf32>
    %5 = vector.broadcast %4 : vector<1x32xf32> to vector<392x32xf32>
    %6 = arith.addf %3, %5 : vector<392x32xf32>
    %cst_5 = arith.constant 0.000000e+00 : f32
    %7 = vector.broadcast %cst_5 : f32 to vector<392x32xf32>
    %8 = arith.maximumf %6, %7 : vector<392x32xf32>
    %9 = arith.truncf %8 : vector<392x32xf32> to vector<392x32xbf16>
    %c0_6 = arith.constant 0 : index
    %c0_7 = arith.constant 0 : index
    %10 = vector.load %arg4[%c0_6, %c0_7] : memref<32x32xbf16, #tpu.memory_space<vmem>>, vector<32x32xbf16>
    %cst_8 = arith.constant dense<0.000000e+00> : vector<392x32xf32>
    %11 = tpu.matmul %9, %10, %cst_8 {dimension_numbers = #tpu.dot_dimension_numbers<[1], [0], [0], [1], [0, 0, 1, 1], [], []>} : vector<392x32xbf16>, vector<32x32xbf16>, vector<392x32xf32> -> vector<392x32xf32>
    %c0_9 = arith.constant 0 : index
    %c0_10 = arith.constant 0 : index
    %12 = vector.load %arg5[%c0_9, %c0_10] : memref<1x32xf32, #tpu.memory_space<vmem>>, vector<1x32xf32>
    %13 = vector.broadcast %12 : vector<1x32xf32> to vector<392x32xf32>
    %14 = arith.addf %11, %13 : vector<392x32xf32>
    %cst_11 = arith.constant 0.000000e+00 : f32
    %15 = vector.broadcast %cst_11 : f32 to vector<392x32xf32>
    %16 = arith.maximumf %14, %15 : vector<392x32xf32>
    %17 = arith.truncf %16 : vector<392x32xf32> to vector<392x32xbf16>
    %c0_12 = arith.constant 0 : index
    %c0_13 = arith.constant 0 : index
    %18 = vector.load %arg6[%c0_12, %c0_13] : memref<32x8xbf16, #tpu.memory_space<vmem>>, vector<32x8xbf16>
    %cst_14 = arith.constant dense<0.000000e+00> : vector<392x8xf32>
    %19 = tpu.matmul %17, %18, %cst_14 {dimension_numbers = #tpu.dot_dimension_numbers<[1], [0], [0], [1], [0, 0, 1, 1], [], []>} : vector<392x32xbf16>, vector<32x8xbf16>, vector<392x8xf32> -> vector<392x8xf32>
    %c0_15 = arith.constant 0 : index
    %c0_16 = arith.constant 0 : index
    %20 = vector.load %arg7[%c0_15, %c0_16] : memref<1x8xf32, #tpu.memory_space<vmem>>, vector<1x8xf32>
    %21 = vector.broadcast %20 : vector<1x8xf32> to vector<392x8xf32>
    %22 = arith.addf %19, %21 : vector<392x8xf32>
    %23 = arith.negf %22 : vector<392x8xf32>
    %24 = math.exp %23 : vector<392x8xf32>
    %cst_17 = arith.constant 1.000000e+00 : f32
    %25 = vector.broadcast %cst_17 : f32 to vector<392x8xf32>
    %26 = arith.addf %25, %24 : vector<392x8xf32>
    %27 = arith.divf %25, %26 : vector<392x8xf32>
    %28 = arith.truncf %27 : vector<392x8xf32> to vector<392x8xbf16>
    %c0_18 = arith.constant 0 : index
    %c0_19 = arith.constant 0 : index
    %29 = vector.load %arg8[%c0_18, %c0_19] : memref<392x8xbf16, #tpu.memory_space<vmem>>, vector<392x8xbf16>
    tpu.vector_store %arg8[%c0_18, %c0_19], %28 {strides = array<i32>} : memref<392x8xbf16, #tpu.memory_space<vmem>>, vector<392x8xbf16>,
    return
  }
  func.func @transform_0(%arg0: i32) -> (i32, i32) {
    %c0_i32 = arith.constant 0 : i32
    %c0_i32_0 = arith.constant 0 : i32
    return %arg0, %c0_i32 : i32, i32
  }
  func.func @transform_1(%arg0: i32) -> (i32, i32) {
    %c0_i32 = arith.constant 0 : i32
    %c0_i32_0 = arith.constant 0 : i32
    %c0_i32_1 = arith.constant 0 : i32
    return %c0_i32, %c0_i32_0 : i32, i32
  }
  func.func @transform_2(%arg0: i32) -> (i32, i32) {
    %c0_i32 = arith.constant 0 : i32
    %c0_i32_0 = arith.constant 0 : i32
    %c0_i32_1 = arith.constant 0 : i32
    return %c0_i32, %c0_i32_0 : i32, i32
  }
  func.func @transform_3(%arg0: i32) -> (i32, i32) {
    %c0_i32 = arith.constant 0 : i32
    %c0_i32_0 = arith.constant 0 : i32
    %c0_i32_1 = arith.constant 0 : i32
    return %c0_i32, %c0_i32_0 : i32, i32
  }
  func.func @transform_4(%arg0: i32) -> (i32, i32) {
    %c0_i32 = arith.constant 0 : i32
    %c0_i32_0 = arith.constant 0 : i32
    %c0_i32_1 = arith.constant 0 : i32
    return %c0_i32, %c0_i32_0 : i32, i32
  }
  func.func @transform_5(%arg0: i32) -> (i32, i32) {
    %c0_i32 = arith.constant 0 : i32
    %c0_i32_0 = arith.constant 0 : i32
    %c0_i32_1 = arith.constant 0 : i32
    return %c0_i32, %c0_i32_0 : i32, i32
  }
  func.func @transform_6(%arg0: i32) -> (i32, i32) {
    %c0_i32 = arith.constant 0 : i32
    %c0_i32_0 = arith.constant 0 : i32
    %c0_i32_1 = arith.constant 0 : i32
    return %c0_i32, %c0_i32_0 : i32, i32
  }
  func.func @transform_7(%arg0: i32) -> (i32, i32) {
    %c0_i32 = arith.constant 0 : i32
    %c0_i32_0 = arith.constant 0 : i32
    return %arg0, %c0_i32 : i32, i32
  }
}

</mosaic_0001>

<llo_original>
// kernel: tpu_custom_call.1
$region0: #{tpu_custom_call.1}
  #allocation0 [shape = 'u32[]', space=smem, size = 0x4, offset = 0x4, fixed_abs, tag = 'smem constant byte address 0x4 - core index']
  #allocation1 [shape = 'u32[144,128]{1,0:T(1,128)}', space=vmem, size = 0x12000, scoped, tag = 'internal scratch']
  %s0 = inlined_call_operand.vmem [shape: f32[777,16], index: 0, kind: input, shape index: {}]
  %s1 = inlined_call_operand.vmem [shape: bf16[16,32], index: 1, kind: input, shape index: {}]
  %s2 = inlined_call_operand.vmem [shape: f32[1,32], index: 2, kind: input, shape index: {}]
  %s3 = inlined_call_operand.vmem [shape: bf16[32,32], index: 3, kind: input, shape index: {}]
  %s4 = inlined_call_operand.vmem [shape: f32[1,32], index: 4, kind: input, shape index: {}]
  %s5 = inlined_call_operand.vmem [shape: bf16[32,8], index: 5, kind: input, shape index: {}]
  %s6 = inlined_call_operand.vmem [shape: f32[1,8], index: 6, kind: input, shape index: {}]
  %s7 = inlined_call_operand.vmem [shape: bf16[777,8], index: 7, kind: output, shape index: {}]
  %s8 = sld [smem:[#allocation0]]
  $region61: #{tpu_custom_call.1} parent=0
    _
  %s10 = ssub.s32 1, %s8
  %s11 = scalar_select 0, %s10, %s8
  loop: start=0, step=1, limit=4
  $region2: #{tpu_custom_call.1} parent=0 // loop_pre_header
    _
  $region3: #{tpu_custom_call.1} parent=0 // loop_header
    %s13 = sphi 0, %s17
    %p14 = scmp.ge.s32.totalorder %s13, 4
    %s23 = sphi 0, %s25
    %s26 = sphi 0, %s23
    %s27 = sphi 0, %s26
    %s43 = sphi 0, %s27
    %s47 = sphi 0, %s47
    %s49 = sphi 0, %s47
    %s50 = sphi 0, %s49
    %s64 = sphi 0, %s50
    %s68 = sphi 0, %s68
    %s70 = sphi 0, %s68
    %s71 = sphi 0, %s70
    %s85 = sphi 0, %s71
    %s89 = sphi 0, %s89
    %s91 = sphi 0, %s89
    %s92 = sphi 0, %s91
    %s106 = sphi 0, %s92
    %s110 = sphi 0, %s110
    %s112 = sphi 0, %s110
    %s113 = sphi 0, %s112
    %s127 = sphi 0, %s113
    %s131 = sphi 0, %s131
    %s133 = sphi 0, %s131
    %s134 = sphi 0, %s133
    %s148 = sphi 0, %s134
    %s152 = sphi 0, %s152
    %s154 = sphi 0, %s152
    %s155 = sphi 0, %s154
    %s169 = sphi 0, %s155
    %s175 = sphi 0, %s177
    %s178 = sphi 0, %s175
    %s179 = sphi 0, %s178
    %s195 = sphi 0, %s179
  $region4: #{tpu_custom_call.1} parent=0 // loop_header_branch
    %16 = sbr.rel (%p14) target = $region8
  $region5: #{tpu_custom_call.1} parent=0 // loop_body
    %s18 = ssub.s32 %s13, 1
    %s19 = ssub.s32 %s13, 2
    %s20 = sadd.s32 %s13, 1
    %s21 = ssub.s32 %s13, %s20
    %p22 = scmp.eq.s32.totalorder %s21, 0
    %s24 = sadd.s32 %s23, 1
    %s25 = scalar_select %p22, %s23, %s24
    %p28 = pneg %p22
    %p29 = scmp.eq.s32.totalorder %s13, 1
    %p30 = por %p28, %p29
    %p31 = scmp.ne.s32.totalorder %s23, %s26
    %p32 = scmp.eq.s32.totalorder %s13, 0
    %p33 = por %p31, %p32
    %p34 = scmp.ne.s32.totalorder %s23, %s26
    %p35 = scmp.eq.s32.totalorder %s18, 1
    %p36 = por %p34, %p35
    %p37 = scmp.ne.s32.totalorder %s26, %s27
    %p38 = scmp.eq.s32.totalorder %s18, 0
    %p39 = por %p37, %p38
    %p40 = scmp.ne.s32.totalorder %s26, %s27
    %p41 = scmp.eq.s32.totalorder %s19, 1
    %p42 = por %p40, %p41
    %p44 = scmp.ne.s32.totalorder %s27, %s43
    %p45 = scmp.eq.s32.totalorder %s19, 0
    %p46 = por %p44, %p45
    %s48 = sadd.s32 %s47, 1
    %p51 = scmp.eq.s32.totalorder %s13, 1
    %p52 = scmp.ne.s32.totalorder %s47, %s49
    %p53 = scmp.eq.s32.totalorder %s13, 0
    %p54 = por %p52, %p53
    %p55 = scmp.ne.s32.totalorder %s47, %s49
    %p56 = scmp.eq.s32.totalorder %s18, 1
    %p57 = por %p55, %p56
    %p58 = scmp.ne.s32.totalorder %s49, %s50
    %p59 = scmp.eq.s32.totalorder %s18, 0
    %p60 = por %p58, %p59
    %p61 = scmp.ne.s32.totalorder %s49, %s50
    %p62 = scmp.eq.s32.totalorder %s19, 1
    %p63 = por %p61, %p62
    %p65 = scmp.ne.s32.totalorder %s50, %s64
    %p66 = scmp.eq.s32.totalorder %s19, 0
    %p67 = por %p65, %p66
    %s69 = sadd.s32 %s68, 1
    %p72 = scmp.eq.s32.totalorder %s13, 1
    %p73 = scmp.ne.s32.totalorder %s68, %s70
    %p74 = scmp.eq.s32.totalorder %s13, 0
    %p75 = por %p73, %p74
    %p76 = scmp.ne.s32.totalorder %s68, %s70
    %p77 = scmp.eq.s32.totalorder %s18, 1
    %p78 = por %p76, %p77
    %p79 = scmp.ne.s32.totalorder %s70, %s71
    %p80 = scmp.eq.s32.totalorder %s18, 0
    %p81 = por %p79, %p80
    %p82 = scmp.ne.s32.totalorder %s70, %s71
    %p83 = scmp.eq.s32.totalorder %s19, 1
    %p84 = por %p82, %p83
    %p86 = scmp.ne.s32.totalorder %s71, %s85
    %p87 = scmp.eq.s32.totalorder %s19, 0
    %p88 = por %p86, %p87
    %s90 = sadd.s32 %s89, 1
    %p93 = scmp.eq.s32.totalorder %s13, 1
    %p94 = scmp.ne.s32.totalorder %s89, %s91
    %p95 = scmp.eq.s32.totalorder %s13, 0
    %p96 = por %p94, %p95
    %p97 = scmp.ne.s32.totalorder %s89, %s91
    %p98 = scmp.eq.s32.totalorder %s18, 1
    %p99 = por %p97, %p98
    %p100 = scmp.ne.s32.totalorder %s91, %s92
    %p101 = scmp.eq.s32.totalorder %s18, 0
    %p102 = por %p100, %p101
    %p103 = scmp.ne.s32.totalorder %s91, %s92
    %p104 = scmp.eq.s32.totalorder %s19, 1
    %p105 = por %p103, %p104
    %p107 = scmp.ne.s32.totalorder %s92, %s106
    %p108 = scmp.eq.s32.totalorder %s19, 0
    %p109 = por %p107, %p108
    %s111 = sadd.s32 %s110, 1
    %p114 = scmp.eq.s32.totalorder %s13, 1
    %p115 = scmp.ne.s32.totalorder %s110, %s112
    %p116 = scmp.eq.s32.totalorder %s13, 0
    %p117 = por %p115, %p116
    %p118 = scmp.ne.s32.totalorder %s110, %s112
    %p119 = scmp.eq.s32.totalorder %s18, 1
    %p120 = por %p118, %p119
    %p121 = scmp.ne.s32.totalorder %s112, %s113
    %p122 = scmp.eq.s32.totalorder %s18, 0
    %p123 = por %p121, %p122
    %p124 = scmp.ne.s32.totalorder %s112, %s113
    %p125 = scmp.eq.s32.totalorder %s19, 1
    %p126 = por %p124, %p125
    %p128 = scmp.ne.s32.totalorder %s113, %s127
    %p129 = scmp.eq.s32.totalorder %s19, 0
    %p130 = por %p128, %p129
    %s132 = sadd.s32 %s131, 1
    %p135 = scmp.eq.s32.totalorder %s13, 1
    %p136 = scmp.ne.s32.totalorder %s131, %s133
    %p137 = scmp.eq.s32.totalorder %s13, 0
    %p138 = por %p136, %p137
    %p139 = scmp.ne.s32.totalorder %s131, %s133
    %p140 = scmp.eq.s32.totalorder %s18, 1
    %p141 = por %p139, %p140
    %p142 = scmp.ne.s32.totalorder %s133, %s134
    %p143 = scmp.eq.s32.totalorder %s18, 0
    %p144 = por %p142, %p143
    %p145 = scmp.ne.s32.totalorder %s133, %s134
    %p146 = scmp.eq.s32.totalorder %s19, 1
    %p147 = por %p145, %p146
    %p149 = scmp.ne.s32.totalorder %s134, %s148
    %p150 = scmp.eq.s32.totalorder %s19, 0
    %p151 = por %p149, %p150
    %s153 = sadd.s32 %s152, 1
    %p156 = scmp.eq.s32.totalorder %s13, 1
    %p157 = scmp.ne.s32.totalorder %s152, %s154
    %p158 = scmp.eq.s32.totalorder %s13, 0
    %p159 = por %p157, %p158
    %p160 = scmp.ne.s32.totalorder %s152, %s154
    %p161 = scmp.eq.s32.totalorder %s18, 1
    %p162 = por %p160, %p161
    %p163 = scmp.ne.s32.totalorder %s154, %s155
    %p164 = scmp.eq.s32.totalorder %s18, 0
    %p165 = por %p163, %p164
    %p166 = scmp.ne.s32.totalorder %s154, %s155
    %p167 = scmp.eq.s32.totalorder %s19, 1
    %p168 = por %p166, %p167
    %p170 = scmp.ne.s32.totalorder %s155, %s169
    %p171 = scmp.eq.s32.totalorder %s19, 0
    %p172 = por %p170, %p171
    %s173 = ssub.s32 %s13, %s20
    %p174 = scmp.eq.s32.totalorder %s173, 0
    %s176 = sadd.s32 %s175, 1
    %s177 = scalar_select %p174, %s175, %s176
    %p180 = pneg %p174
    %p181 = scmp.eq.s32.totalorder %s13, 1
    %p182 = por %p180, %p181
    %p183 = scmp.ne.s32.totalorder %s175, %s178
    %p184 = scmp.eq.s32.totalorder %s13, 0
    %p185 = por %p183, %p184
    %p186 = scmp.ne.s32.totalorder %s175, %s178
    %p187 = scmp.eq.s32.totalorder %s18, 1
    %p188 = por %p186, %p187
    %p189 = scmp.ne.s32.totalorder %s178, %s179
    %p190 = scmp.eq.s32.totalorder %s18, 0
    %p191 = por %p189, %p190
    %p192 = scmp.ne.s32.totalorder %s178, %s179
    %p193 = scmp.eq.s32.totalorder %s19, 1
    %p194 = por %p192, %p193
    %p196 = scmp.ne.s32.totalorder %s179, %s195
    %p197 = scmp.eq.s32.totalorder %s19, 0
    %p198 = por %p196, %p197
    %p199 = scmp.le.s32.totalorder 1, %s13
    %p200 = scmp.lt.s32.totalorder %s13, 3
    %p201 = pnand %p199, %p200
    %p202 = pneg %p201
    // Predicated region
    $region9: #{tpu_custom_call.1} parent=5 // pred_check
      _
    $region10: #{tpu_custom_call.1} parent=5 // pred_check_branch
      %204 = sbr.rel (%p201) target = $region12
    $region11: #{tpu_custom_call.1} parent=5 // pred_region
      %s205 = ssub.s32 %s13, 1
      // Predicated region
      $region13: #{tpu_custom_call.1} parent=11 // pred_check
        %p206 = pneg %p60
      $region14: #{tpu_custom_call.1} parent=11 // pred_check_branch
        %208 = sbr.rel (%p206) target = $region16
      $region15: #{tpu_custom_call.1} parent=11 // pred_region
        _
      $region16: #{tpu_custom_call.1} parent=11 // pred_fallthru
        _
      // Predicated region
      $region17: #{tpu_custom_call.1} parent=11 // pred_check
        %p209 = pneg %p81
      $region18: #{tpu_custom_call.1} parent=11 // pred_check_branch
        %211 = sbr.rel (%p209) target = $region20
      $region19: #{tpu_custom_call.1} parent=11 // pred_region
        _
      $region20: #{tpu_custom_call.1} parent=11 // pred_fallthru
        _
      // Predicated region
      $region21: #{tpu_custom_call.1} parent=11 // pred_check
        %p212 = pneg %p102
      $region22: #{tpu_custom_call.1} parent=11 // pred_check_branch
        %214 = sbr.rel (%p212) target = $region24
      $region23: #{tpu_custom_call.1} parent=11 // pred_region
        _
      $region24: #{tpu_custom_call.1} parent=11 // pred_fallthru
        _
      // Predicated region
      $region25: #{tpu_custom_call.1} parent=11 // pred_check
        %p215 = pneg %p123
      $region26: #{tpu_custom_call.1} parent=11 // pred_check_branch
        %217 = sbr.rel (%p215) target = $region28
      $region27: #{tpu_custom_call.1} parent=11 // pred_region
        _
      $region28: #{tpu_custom_call.1} parent=11 // pred_fallthru
        _
      // Predicated region
      $region29: #{tpu_custom_call.1} parent=11 // pred_check
        %p218 = pneg %p144
      $region30: #{tpu_custom_call.1} parent=11 // pred_check_branch
        %220 = sbr.rel (%p218) target = $region32
      $region31: #{tpu_custom_call.1} parent=11 // pred_region
        _
      $region32: #{tpu_custom_call.1} parent=11 // pred_fallthru
        _
      // Predicated region
      $region33: #{tpu_custom_call.1} parent=11 // pred_check
        %p221 = pneg %p165
      $region34: #{tpu_custom_call.1} parent=11 // pred_check_branch
        %223 = sbr.rel (%p221) target = $region36
      $region35: #{tpu_custom_call.1} parent=11 // pred_region
        _
      $region36: #{tpu_custom_call.1} parent=11 // pred_fallthru
        _
    $region12: #{tpu_custom_call.1} parent=5 // pred_fallthru
      _
    %p224 = scmp.lt.s32.totalorder %s13, 2
    // Predicated region
    $region37: #{tpu_custom_call.1} parent=5 // pred_check
      %p225 = pneg %p224
    $region38: #{tpu_custom_call.1} parent=5 // pred_check_branch
      %227 = sbr.rel (%p225) target = $region40
    $region39: #{tpu_custom_call.1} parent=5 // pred_region
      // Predicated region
      $region41: #{tpu_custom_call.1} parent=39 // pred_check
        %p228 = pneg %p33
      $region42: #{tpu_custom_call.1} parent=39 // pred_check_branch
        %230 = sbr.rel (%p228) target = $region44
      $region43: #{tpu_custom_call.1} parent=39 // pred_region
        %s231 = smul.u32 49, %s13
        %p232 = scmp.lt.s32.totalorder %s231, 97
        %s233 = scalar_select %p232, %s231, 97
        %s234 = smul.addr %s233, 8
        %s235 = scalar_lea.vmem %s0, %s234
        %s236 = smul.u32 49, %s13
      $region44: #{tpu_custom_call.1} parent=39 // pred_fallthru
        _
    $region40: #{tpu_custom_call.1} parent=5 // pred_fallthru
      _
    %p237 = scmp.le.s32.totalorder 1, %s13
    %p238 = scmp.lt.s32.totalorder %s13, 3
    %p239 = pnand %p237, %p238
    %p240 = pneg %p239
    // Predicated region
    $region45: #{tpu_custom_call.1} parent=5 // pred_check
      _
    $region46: #{tpu_custom_call.1} parent=5 // pred_check_branch
      %242 = sbr.rel (%p239) target = $region48
    $region47: #{tpu_custom_call.1} parent=5 // pred_region
      %s243 = ssub.s32 %s13, 1
      %s244 = smul.u32 49, %s18
      %p245 = scmp.lt.s32.totalorder %s244, 97
      %s246 = scalar_select %p245, %s244, 97
      %s247 = smul.addr %s246, 8
      %s248 = scalar_lea.vmem %s0, %s247
      %p249 = pneg %p39
      %p250 = pneg %p36
      %p251 = pneg %p60
      %p252 = pneg %p57
      %p253 = pneg %p81
      %p254 = pneg %p78
      %p255 = pneg %p102
      %p256 = pneg %p99
      %p257 = pneg %p123
      %p258 = pneg %p120
      %p259 = pneg %p144
      %p260 = pneg %p141
      %p261 = pneg %p165
      %p262 = pneg %p162
      %p263 = pneg %p191
      %p264 = pneg %p188
      %s265 = smul.u32 49, %s18
      %p266 = scmp.lt.s32.totalorder %s265, 97
      %s267 = scalar_select %p266, %s265, 97
      %s268 = smul.addr %s267, 4
      %s269 = scalar_lea.vmem %s7, %s268
      %s270 = smul.u32 49, %s18
      %p271 = scmp.lt.s32.totalorder %s270, 97
      %s272 = scalar_select %p271, %s270, 97
      %s273 = smul.addr %s272, 8
      %s274 = scalar_lea.vmem %s0, %s273
      %s275 = smul.u32 49, %s18
      %s276 = smul.u32 49, %s18
      %p277 = scmp.lt.s32.totalorder %s276, 97
      %s278 = scalar_select %p277, %s276, 97
      %s279 = smul.addr %s278, 4
      %s280 = scalar_lea.vmem %s7, %s279
      %s281 = smul.u32 49, %s18
      %v283 = vld [vmem:[%s274] sm:$0xff]
      %v284 = vld [vmem:[%s274 + $0x8] sm:$0xff]
      %v285 = vld [vmem:[%s274 + $0x10] sm:$0xff]
      %v286 = vld [vmem:[%s274 + $0x18] sm:$0xff]
      %v287 = vld [vmem:[%s274 + $0x20] sm:$0xff]
      %v288 = vld [vmem:[%s274 + $0x28] sm:$0xff]
      %v289 = vld [vmem:[%s274 + $0x30] sm:$0xff]
      %v290 = vld [vmem:[%s274 + $0x38] sm:$0xff]
      %v291 = vld [vmem:[%s274 + $0x40] sm:$0xff]
      %v292 = vld [vmem:[%s274 + $0x48] sm:$0xff]
      %v293 = vld [vmem:[%s274 + $0x50] sm:$0xff]
      %v294 = vld [vmem:[%s274 + $0x58] sm:$0xff]
      %v295 = vld [vmem:[%s274 + $0x60] sm:$0xff]
      %v296 = vld [vmem:[%s274 + $0x68] sm:$0xff]
      %v297 = vld [vmem:[%s274 + $0x70] sm:$0xff]
      %v298 = vld [vmem:[%s274 + $0x78] sm:$0xff]
      %v299 = vld [vmem:[%s274 + $0x80] sm:$0xff]
      %v300 = vld [vmem:[%s274 + $0x88] sm:$0xff]
      %v301 = vld [vmem:[%s274 + $0x90] sm:$0xff]
      %v302 = vld [vmem:[%s274 + $0x98] sm:$0xff]
      %v303 = vld [vmem:[%s274 + $0xa0] sm:$0xff]
      %v304 = vld [vmem:[%s274 + $0xa8] sm:$0xff]
      %v305 = vld [vmem:[%s274 + $0xb0] sm:$0xff]
      %v306 = vld [vmem:[%s274 + $0xb8] sm:$0xff]
      %v307 = vld [vmem:[%s274 + $0xc0] sm:$0xff]
      %v308 = vld [vmem:[%s274 + $0xc8] sm:$0xff]
      %v309 = vld [vmem:[%s274 + $0xd0] sm:$0xff]
      %v310 = vld [vmem:[%s274 + $0xd8] sm:$0xff]
      %v311 = vld [vmem:[%s274 + $0xe0] sm:$0xff]
      %v312 = vld [vmem:[%s274 + $0xe8] sm:$0xff]
      %v313 = vld [vmem:[%s274 + $0xf0] sm:$0xff]
      %v314 = vld [vmem:[%s274 + $0xf8] sm:$0xff]
      %v315 = vld [vmem:[%s274 + $0x100] sm:$0xff]
      %v316 = vld [vmem:[%s274 + $0x108] sm:$0xff]
      %v317 = vld [vmem:[%s274 + $0x110] sm:$0xff]
      %v318 = vld [vmem:[%s274 + $0x118] sm:$0xff]
      %v319 = vld [vmem:[%s274 + $0x120] sm:$0xff]
      %v320 = vld [vmem:[%s274 + $0x128] sm:$0xff]
      %v321 = vld [vmem:[%s274 + $0x130] sm:$0xff]
      %v322 = vld [vmem:[%s274 + $0x138] sm:$0xff]
      %v323 = vld [vmem:[%s274 + $0x140] sm:$0xff]
      %v324 = vld [vmem:[%s274 + $0x148] sm:$0xff]
      %v325 = vld [vmem:[%s274 + $0x150] sm:$0xff]
      %v326 = vld [vmem:[%s274 + $0x158] sm:$0xff]
      %v327 = vld [vmem:[%s274 + $0x160] sm:$0xff]
      %v328 = vld [vmem:[%s274 + $0x168] sm:$0xff]
      %v329 = vld [vmem:[%s274 + $0x170] sm:$0xff]
      %v330 = vld [vmem:[%s274 + $0x178] sm:$0xff]
      %v331 = vld [vmem:[%s274 + $0x180] sm:$0xff]
      %v332 = vpack.c.bf16 %v284, %v283
      %v333 = vpack.c.bf16 %v286, %v285
      %v334 = vpack.c.bf16 %v288, %v287
      %v335 = vpack.c.bf16 %v290, %v289
      %v336 = vpack.c.bf16 %v292, %v291
      %v337 = vpack.c.bf16 %v294, %v293
      %v338 = vpack.c.bf16 %v296, %v295
      %v339 = vpack.c.bf16 %v298, %v297
      %v340 = vpack.c.bf16 %v300, %v299
      %v341 = vpack.c.bf16 %v302, %v301
      %v342 = vpack.c.bf16 %v304, %v303
      %v343 = vpack.c.bf16 %v306, %v305
      %v344 = vpack.c.bf16 %v308, %v307
      %v345 = vpack.c.bf16 %v310, %v309
      %v346 = vpack.c.bf16 %v312, %v311
      %v347 = vpack.c.bf16 %v314, %v313
      %v348 = vpack.c.bf16 %v316, %v315
      %v349 = vpack.c.bf16 %v318, %v317
      %v350 = vpack.c.bf16 %v320, %v319
      %v351 = vpack.c.bf16 %v322, %v321
      %v352 = vpack.c.bf16 %v324, %v323
      %v353 = vpack.c.bf16 %v326, %v325
      %v354 = vpack.c.bf16 %v328, %v327
      %v355 = vpack.c.bf16 %v330, %v329
      %v356 = vpack.c.bf16 %v331, %v331
      %v357 = vld [vmem:[%s1] sm:$0xf]
      %v358 = vld [vmem:[%s1 + $0x4] sm:$0xf]
      %v359 = vld [vmem:[%s2] sm:$0x1]
      %v361 = vlaneseq
      %v362 = vshrl.u32 %v361, 7
      %v363 = vsub.s32 0, %v362
      %v364 = vrot.slane %v359, %v363
      %v368 = vunpack.c.l.b16 %v357
      %v369 = vunpack.c.l.b16 %v358
      %v370 = vpack.c.b16 %v369, %v368
      %vm372 = vcmask 130048
      %v374 = vsel %vm372, %v332, 0
      %v377 = vsel %vm372, %v333, 0
      %v380 = vsel %vm372, %v334, 0
      %v383 = vsel %vm372, %v335, 0
      %v386 = vsel %vm372, %v336, 0
      %v389 = vsel %vm372, %v337, 0
      %v392 = vsel %vm372, %v338, 0
      %v395 = vsel %vm372, %v339, 0
      %v398 = vsel %vm372, %v340, 0
      %v401 = vsel %vm372, %v341, 0
      %v404 = vsel %vm372, %v342, 0
      %v407 = vsel %vm372, %v343, 0
      %v410 = vsel %vm372, %v344, 0
      %v413 = vsel %vm372, %v345, 0
      %v416 = vsel %vm372, %v346, 0
      %v419 = vsel %vm372, %v347, 0
      %v422 = vsel %vm372, %v348, 0
      %v425 = vsel %vm372, %v349, 0
      %v428 = vsel %vm372, %v350, 0
      %v431 = vsel %vm372, %v351, 0
      %v434 = vsel %vm372, %v352, 0
      %v437 = vsel %vm372, %v353, 0
      %v440 = vsel %vm372, %v354, 0
      %v443 = vsel %vm372, %v355, 0
      %v446 = vsel %vm372, %v356, 0
      %448 = vmatprep.subr.bf16.mxu0 0
      %449 = vmatpush1.bf16.msra.mxu0 %v370
      %450 = vmatprep.subr.bf16.mxu0 0
      %451 = vmatpush1.bf16.msra.mxu0 0
      %452 = vmatprep.subr.bf16.mxu0 0
      %453 = vmatpush1.bf16.msra.mxu0 0
      %454 = vmatprep.subr.bf16.mxu0 0
      %455 = vmatpush1.bf16.msra.mxu0 0
      %456 = vmatprep.subr.bf16.mxu0 0
      %457 = vmatpush1.bf16.msra.mxu0 0
      %458 = vmatprep.subr.bf16.mxu0 0
      %459 = vmatpush1.bf16.msra.mxu0 0
      %460 = vmatprep.subr.bf16.mxu0 0
      %461 = vmatpush1.bf16.msra.mxu0 0
      %462 = vmatprep.subr.bf16.mxu0 0
      %463 = vmatpush1.bf16.msra.mxu0 0
      %464 = vmatprep.subr.bf16.mxu0 0
      %465 = vmatpush1.bf16.msra.mxu0 0
      %466 = vmatprep.subr.bf16.mxu0 0
      %467 = vmatpush1.bf16.msra.mxu0 0
      %468 = vmatprep.subr.bf16.mxu0 0
      %469 = vmatpush1.bf16.msra.mxu0 0
      %470 = vmatprep.subr.bf16.mxu0 0
      %471 = vmatpush1.bf16.msra.mxu0 0
      %472 = vmatprep.subr.bf16.mxu0 0
      %473 = vmatpush1.bf16.msra.mxu0 0
      %474 = vmatprep.subr.bf16.mxu0 0
      %475 = vmatpush1.bf16.msra.mxu0 0
      %476 = vmatprep.subr.bf16.mxu0 0
      %477 = vmatpush1.bf16.msra.mxu0 0
      %478 = vmatprep.subr.bf16.mxu0 0
      %479 = vmatpush1.bf16.msra.mxu0 0
      %480 = vmatprep.mubr.bf16.mxu0 0
      %481 = vmatmul.mubr.bf16.gmra.mrb[0].mxu0 %v374
      %v482 = vpop.f32.mrb[0].mxu0
      %v483 = vadd.f32 %v364, %v482
      %v484 = vpop.f32.mrb[0].mxu0
      %v485 = vpop.f32.mrb[0].mxu0
      %v486 = vadd.f32 %v364, %v485
      %v487 = vpop.f32.mrb[0].mxu0
      %488 = vmatprep.mubr.bf16.mxu0 0
      %489 = vmatmul.mubr.bf16.gmra.mrb[0].mxu0 %v377
      %v490 = vpop.f32.mrb[0].mxu0
      %v491 = vadd.f32 %v364, %v490
      %v492 = vpop.f32.mrb[0].mxu0
      %v493 = vpop.f32.mrb[0].mxu0
      %v494 = vadd.f32 %v364, %v493
      %v495 = vpop.f32.mrb[0].mxu0
      %496 = vmatprep.mubr.bf16.mxu0 0
      %497 = vmatmul.mubr.bf16.gmra.mrb[0].mxu0 %v380
      %v498 = vpop.f32.mrb[0].mxu0
      %v499 = vadd.f32 %v364, %v498
      %v500 = vpop.f32.mrb[0].mxu0
      %v501 = vpop.f32.mrb[0].mxu0
      %v502 = vadd.f32 %v364, %v501
      %v503 = vpop.f32.mrb[0].mxu0
      %504 = vmatprep.mubr.bf16.mxu0 0
      %505 = vmatmul.mubr.bf16.gmra.mrb[0].mxu0 %v383
      %v506 = vpop.f32.mrb[0].mxu0
      %v507 = vadd.f32 %v364, %v506
      %v508 = vpop.f32.mrb[0].mxu0
      %v509 = vpop.f32.mrb[0].mxu0
      %v510 = vadd.f32 %v364, %v509
      %v511 = vpop.f32.mrb[0].mxu0
      %512 = vmatprep.mubr.bf16.mxu0 0
      %513 = vmatmul.mubr.bf16.gmra.mrb[0].mxu0 %v386
      %v514 = vpop.f32.mrb[0].mxu0
      %v515 = vadd.f32 %v364, %v514
      %v516 = vpop.f32.mrb[0].mxu0
      %v517 = vpop.f32.mrb[0].mxu0
      %v518 = vadd.f32 %v364, %v517
      %v519 = vpop.f32.mrb[0].mxu0
      %520 = vmatprep.mubr.bf16.mxu0 0
      %521 = vmatmul.mubr.bf16.gmra.mrb[0].mxu0 %v389
      %v522 = vpop.f32.mrb[0].mxu0
      %v523 = vadd.f32 %v364, %v522
      %v524 = vpop.f32.mrb[0].mxu0
      %v525 = vpop.f32.mrb[0].mxu0
      %v526 = vadd.f32 %v364, %v525
      %v527 = vpop.f32.mrb[0].mxu0
      %528 = vmatprep.mubr.bf16.mxu0 0
      %529 = vmatmul.mubr.bf16.gmra.mrb[0].mxu0 %v392
      %v530 = vpop.f32.mrb[0].mxu0
      %v531 = vadd.f32 %v364, %v530
      %v532 = vpop.f32.mrb[0].mxu0
      %v533 = vpop.f32.mrb[0].mxu0
      %v534 = vadd.f32 %v364, %v533
      %v535 = vpop.f32.mrb[0].mxu0
      %536 = vmatprep.mubr.bf16.mxu0 0
      %537 = vmatmul.mubr.bf16.gmra.mrb[0].mxu0 %v395
      %v538 = vpop.f32.mrb[0].mxu0
      %v539 = vadd.f32 %v364, %v538
      %v540 = vpop.f32.mrb[0].mxu0
      %v541 = vpop.f32.mrb[0].mxu0
      %v542 = vadd.f32 %v364, %v541
      %v543 = vpop.f32.mrb[0].mxu0
      %544 = vmatprep.mubr.bf16.mxu0 0
      %545 = vmatmul.mubr.bf16.gmra.mrb[0].mxu0 %v398
      %v546 = vpop.f32.mrb[0].mxu0
      %v547 = vadd.f32 %v364, %v546
      %v548 = vpop.f32.mrb[0].mxu0
      %v549 = vpop.f32.mrb[0].mxu0
      %v550 = vadd.f32 %v364, %v549
      %v551 = vpop.f32.mrb[0].mxu0
      %552 = vmatprep.mubr.bf16.mxu0 0
      %553 = vmatmul.mubr.bf16.gmra.mrb[0].mxu0 %v401
      %v554 = vpop.f32.mrb[0].mxu0
      %v555 = vadd.f32 %v364, %v554
      %v556 = vpop.f32.mrb[0].mxu0
      %v557 = vpop.f32.mrb[0].mxu0
      %v558 = vadd.f32 %v364, %v557
      %v559 = vpop.f32.mrb[0].mxu0
      %560 = vmatprep.mubr.bf16.mxu0 0
      %561 = vmatmul.mubr.bf16.gmra.mrb[0].mxu0 %v404
      %v562 = vpop.f32.mrb[0].mxu0
      %v563 = vadd.f32 %v364, %v562
      %v564 = vpop.f32.mrb[0].mxu0
      %v565 = vpop.f32.mrb[0].mxu0
      %v566 = vadd.f32 %v364, %v565
      %v567 = vpop.f32.mrb[0].mxu0
      %568 = vmatprep.mubr.bf16.mxu0 0
      %569 = vmatmul.mubr.bf16.gmra.mrb[0].mxu0 %v407
      %v570 = vpop.f32.mrb[0].mxu0
      %v571 = vadd.f32 %v364, %v570
      %v572 = vpop.f32.mrb[0].mxu0
      %v573 = vpop.f32.mrb[0].mxu0
      %v574 = vadd.f32 %v364, %v573
      %v575 = vpop.f32.mrb[0].mxu0
      %576 = vmatprep.mubr.bf16.mxu0 0
      %577 = vmatmul.mubr.bf16.gmra.mrb[0].mxu0 %v410
      %v578 = vpop.f32.mrb[0].mxu0
      %v579 = vadd.f32 %v364, %v578
      %v580 = vpop.f32.mrb[0].mxu0
      %v581 = vpop.f32.mrb[0].mxu0
      %v582 = vadd.f32 %v364, %v581
      %v583 = vpop.f32.mrb[0].mxu0
      %584 = vmatprep.mubr.bf16.mxu0 0
      %585 = vmatmul.mubr.bf16.gmra.mrb[0].mxu0 %v413
      %v586 = vpop.f32.mrb[0].mxu0
      %v587 = vadd.f32 %v364, %v586
      %v588 = vpop.f32.mrb[0].mxu0
      %v589 = vpop.f32.mrb[0].mxu0
      %v590 = vadd.f32 %v364, %v589
      %v591 = vpop.f32.mrb[0].mxu0
      %592 = vmatprep.mubr.bf16.mxu0 0
      %593 = vmatmul.mubr.bf16.gmra.mrb[0].mxu0 %v416
      %v594 = vpop.f32.mrb[0].mxu0
      %v595 = vadd.f32 %v364, %v594
      %v596 = vpop.f32.mrb[0].mxu0
      %v597 = vpop.f32.mrb[0].mxu0
      %v598 = vadd.f32 %v364, %v597
      %v599 = vpop.f32.mrb[0].mxu0
      %600 = vmatprep.mubr.bf16.mxu0 0
      %601 = vmatmul.mubr.bf16.gmra.mrb[0].mxu0 %v419
      %v602 = vpop.f32.mrb[0].mxu0
      %v603 = vadd.f32 %v364, %v602
      %v604 = vpop.f32.mrb[0].mxu0
      %v605 = vpop.f32.mrb[0].mxu0
      %v606 = vadd.f32 %v364, %v605
      %v607 = vpop.f32.mrb[0].mxu0
      %608 = vmatprep.mubr.bf16.mxu0 0
      %609 = vmatmul.mubr.bf16.gmra.mrb[0].mxu0 %v422
      %v610 = vpop.f32.mrb[0].mxu0
      %v611 = vadd.f32 %v364, %v610
      %v612 = vpop.f32.mrb[0].mxu0
      %v613 = vpop.f32.mrb[0].mxu0
      %v614 = vadd.f32 %v364, %v613
      %v615 = vpop.f32.mrb[0].mxu0
      %616 = vmatprep.mubr.bf16.mxu0 0
      %617 = vmatmul.mubr.bf16.gmra.mrb[0].mxu0 %v425
      %v618 = vpop.f32.mrb[0].mxu0
      %v619 = vadd.f32 %v364, %v618
      %v620 = vpop.f32.mrb[0].mxu0
      %v621 = vpop.f32.mrb[0].mxu0
      %v622 = vadd.f32 %v364, %v621
      %v623 = vpop.f32.mrb[0].mxu0
      %624 = vmatprep.mubr.bf16.mxu0 0
      %625 = vmatmul.mubr.bf16.gmra.mrb[0].mxu0 %v428
      %v626 = vpop.f32.mrb[0].mxu0
      %v627 = vadd.f32 %v364, %v626
      %v628 = vpop.f32.mrb[0].mxu0
      %v629 = vpop.f32.mrb[0].mxu0
      %v630 = vadd.f32 %v364, %v629
      %v631 = vpop.f32.mrb[0].mxu0
      %632 = vmatprep.mubr.bf16.mxu0 0
      %633 = vmatmul.mubr.bf16.gmra.mrb[0].mxu0 %v431
      %v634 = vpop.f32.mrb[0].mxu0
      %v635 = vadd.f32 %v364, %v634
      %v636 = vpop.f32.mrb[0].mxu0
      %v637 = vpop.f32.mrb[0].mxu0
      %v638 = vadd.f32 %v364, %v637
      %v639 = vpop.f32.mrb[0].mxu0
      %640 = vmatprep.mubr.bf16.mxu0 0
      %641 = vmatmul.mubr.bf16.gmra.mrb[0].mxu0 %v434
      %v642 = vpop.f32.mrb[0].mxu0
      %v643 = vadd.f32 %v364, %v642
      %v644 = vpop.f32.mrb[0].mxu0
      %v645 = vpop.f32.mrb[0].mxu0
      %v646 = vadd.f32 %v364, %v645
      %v647 = vpop.f32.mrb[0].mxu0
      %648 = vmatprep.mubr.bf16.mxu0 0
      %649 = vmatmul.mubr.bf16.gmra.mrb[0].mxu0 %v437
      %v650 = vpop.f32.mrb[0].mxu0
      %v651 = vadd.f32 %v364, %v650
      %v652 = vpop.f32.mrb[0].mxu0
      %v653 = vpop.f32.mrb[0].mxu0
      %v654 = vadd.f32 %v364, %v653
      %v655 = vpop.f32.mrb[0].mxu0
      %656 = vmatprep.mubr.bf16.mxu0 0
      %657 = vmatmul.mubr.bf16.gmra.mrb[0].mxu0 %v440
      %v658 = vpop.f32.mrb[0].mxu0
      %v659 = vadd.f32 %v364, %v658
      %v660 = vpop.f32.mrb[0].mxu0
      %v661 = vpop.f32.mrb[0].mxu0
      %v662 = vadd.f32 %v364, %v661
      %v663 = vpop.f32.mrb[0].mxu0
      %664 = vmatprep.mubr.bf16.mxu0 0
      %665 = vmatmul.mubr.bf16.gmra.mrb[0].mxu0 %v443
      %v666 = vpop.f32.mrb[0].mxu0
      %v667 = vadd.f32 %v364, %v666
      %v668 = vpop.f32.mrb[0].mxu0
      %v669 = vpop.f32.mrb[0].mxu0
      %v670 = vadd.f32 %v364, %v669
      %v671 = vpop.f32.mrb[0].mxu0
      %672 = vmatprep.mubr.bf16.mxu0 0
      %673 = vmatmul.mubr.bf16.gmra.mrb[0].mxu0 %v446
      %v674 = vpop.f32.mrb[0].mxu0
      %v675 = vadd.f32 %v364, %v674
      %v676 = vpop.f32.mrb[0].mxu0
      %v677 = vpop.f32.mrb[0].mxu0
      %v678 = vpop.f32.mrb[0].mxu0
      %679 = vdwg.mxu0
      %v680 = vmax.f32 %v483, 0.0
      %v681 = vmax.f32 %v486, 0.0
      %v682 = vmax.f32 %v491, 0.0
      %v683 = vmax.f32 %v494, 0.0
      %v684 = vmax.f32 %v499, 0.0
      %v685 = vmax.f32 %v502, 0.0
      %v686 = vmax.f32 %v507, 0.0
      %v687 = vmax.f32 %v510, 0.0
      %v688 = vmax.f32 %v515, 0.0
      %v689 = vmax.f32 %v518, 0.0
      %v690 = vmax.f32 %v523, 0.0
      %v691 = vmax.f32 %v526, 0.0
      %v692 = vmax.f32 %v531, 0.0
      %v693 = vmax.f32 %v534, 0.0
      %v694 = vmax.f32 %v539, 0.0
      %v695 = vmax.f32 %v542, 0.0
      %v696 = vmax.f32 %v547, 0.0
      %v697 = vmax.f32 %v550, 0.0
      %v698 = vmax.f32 %v555, 0.0
      %v699 = vmax.f32 %v558, 0.0
      %v700 = vmax.f32 %v563, 0.0
      %v701 = vmax.f32 %v566, 0.0
      %v702 = vmax.f32 %v571, 0.0
      %v703 = vmax.f32 %v574, 0.0
      %v704 = vmax.f32 %v579, 0.0
      %v705 = vmax.f32 %v582, 0.0
      %v706 = vmax.f32 %v587, 0.0
      %v707 = vmax.f32 %v590, 0.0
      %v708 = vmax.f32 %v595, 0.0
      %v709 = vmax.f32 %v598, 0.0
      %v710 = vmax.f32 %v603, 0.0
      %v711 = vmax.f32 %v606, 0.0
      %v712 = vmax.f32 %v611, 0.0
      %v713 = vmax.f32 %v614, 0.0
      %v714 = vmax.f32 %v619, 0.0
      %v715 = vmax.f32 %v622, 0.0
      %v716 = vmax.f32 %v627, 0.0
      %v717 = vmax.f32 %v630, 0.0
      %v718 = vmax.f32 %v635, 0.0
      %v719 = vmax.f32 %v638, 0.0
      %v720 = vmax.f32 %v643, 0.0
      %v721 = vmax.f32 %v646, 0.0
      %v722 = vmax.f32 %v651, 0.0
      %v723 = vmax.f32 %v654, 0.0
      %v724 = vmax.f32 %v659, 0.0
      %v725 = vmax.f32 %v662, 0.0
      %v726 = vmax.f32 %v667, 0.0
      %v727 = vmax.f32 %v670, 0.0
      %v728 = vmax.f32 %v675, 0.0
      %v729 = vpack.c.bf16 %v681, %v680
      %v730 = vpack.c.bf16 %v683, %v682
      %v731 = vpack.c.bf16 %v685, %v684
      %v732 = vpack.c.bf16 %v687, %v686
      %v733 = vpack.c.bf16 %v689, %v688
      %v734 = vpack.c.bf16 %v691, %v690
      %v735 = vpack.c.bf16 %v693, %v692
      %v736 = vpack.c.bf16 %v695, %v694
      %v737 = vpack.c.bf16 %v697, %v696
      %v738 = vpack.c.bf16 %v699, %v698
      %v739 = vpack.c.bf16 %v701, %v700
      %v740 = vpack.c.bf16 %v703, %v702
      %v741 = vpack.c.bf16 %v705, %v704
      %v742 = vpack.c.bf16 %v707, %v706
      %v743 = vpack.c.bf16 %v709, %v708
      %v744 = vpack.c.bf16 %v711, %v710
      %v745 = vpack.c.bf16 %v713, %v712
      %v746 = vpack.c.bf16 %v715, %v714
      %v747 = vpack.c.bf16 %v717, %v716
      %v748 = vpack.c.bf16 %v719, %v718
      %v749 = vpack.c.bf16 %v721, %v720
      %v750 = vpack.c.bf16 %v723, %v722
      %v751 = vpack.c.bf16 %v725, %v724
      %v752 = vpack.c.bf16 %v727, %v726
      %v753 = vpack.c.bf16 %v728, %v728
      %v754 = vld [vmem:[%s3] sm:$0xf]
      %v755 = vld [vmem:[%s3 + $0x4] sm:$0xf]
      %v756 = vld [vmem:[%s3 + $0x8] sm:$0xf]
      %v757 = vld [vmem:[%s3 + $0xc] sm:$0xf]
      %v758 = vld [vmem:[%s4] sm:$0x1]
      %v760 = vlaneseq
      %v761 = vshrl.u32 %v760, 7
      %v762 = vsub.s32 0, %v761
      %v763 = vrot.slane %v758, %v762
      %v769 = vunpack.c.l.b16 %v754
      %v770 = vunpack.c.l.b16 %v755
      %v771 = vunpack.c.l.b16 %v756
      %v772 = vunpack.c.l.b16 %v757
      %v773 = vpack.c.b16 %v770, %v769
      %v774 = vpack.c.b16 %v772, %v771
      %vm777 = vcmask 261120
      %v779 = vsel %vm777, %v729, 0
      %v782 = vsel %vm777, %v730, 0
      %v785 = vsel %vm777, %v731, 0
      %v788 = vsel %vm777, %v732, 0
      %v791 = vsel %vm777, %v733, 0
      %v794 = vsel %vm777, %v734, 0
      %v797 = vsel %vm777, %v735, 0
      %v800 = vsel %vm777, %v736, 0
      %v803 = vsel %vm777, %v737, 0
      %v806 = vsel %vm777, %v738, 0
      %v809 = vsel %vm777, %v739, 0
      %v812 = vsel %vm777, %v740, 0
      %v815 = vsel %vm777, %v741, 0
      %v818 = vsel %vm777, %v742, 0
      %v821 = vsel %vm777, %v743, 0
      %v824 = vsel %vm777, %v744, 0
      %v827 = vsel %vm777, %v745, 0
      %v830 = vsel %vm777, %v746, 0
      %v833 = vsel %vm777, %v747, 0
      %v836 = vsel %vm777, %v748, 0
      %v839 = vsel %vm777, %v749, 0
      %v842 = vsel %vm777, %v750, 0
      %v845 = vsel %vm777, %v751, 0
      %v848 = vsel %vm777, %v752, 0
      %v851 = vsel %vm777, %v753, 0
      %853 = vmatprep.subr.bf16.mxu0 0
      %854 = vmatpush1.bf16.msra.mxu0 %v773
      %855 = vmatprep.subr.bf16.mxu0 0
      %856 = vmatpush1.bf16.msra.mxu0 %v774
      %857 = vmatprep.subr.bf16.mxu0 0
      %858 = vmatpush1.bf16.msra.mxu0 0
      %859 = vmatprep.subr.bf16.mxu0 0
      %860 = vmatpush1.bf16.msra.mxu0 0
      %861 = vmatprep.subr.bf16.mxu0 0
      %862 = vmatpush1.bf16.msra.mxu0 0
      %863 = vmatprep.subr.bf16.mxu0 0
      %864 = vmatpush1.bf16.msra.mxu0 0
      %865 = vmatprep.subr.bf16.mxu0 0
      %866 = vmatpush1.bf16.msra.mxu0 0
      %867 = vmatprep.subr.bf16.mxu0 0
      %868 = vmatpush1.bf16.msra.mxu0 0
      %869 = vmatprep.subr.bf16.mxu0 0
      %870 = vmatpush1.bf16.msra.mxu0 0
      %871 = vmatprep.subr.bf16.mxu0 0
      %872 = vmatpush1.bf16.msra.mxu0 0
      %873 = vmatprep.subr.bf16.mxu0 0
      %874 = vmatpush1.bf16.msra.mxu0 0
      %875 = vmatprep.subr.bf16.mxu0 0
      %876 = vmatpush1.bf16.msra.mxu0 0
      %877 = vmatprep.subr.bf16.mxu0 0
      %878 = vmatpush1.bf16.msra.mxu0 0
      %879 = vmatprep.subr.bf16.mxu0 0
      %880 = vmatpush1.bf16.msra.mxu0 0
      %881 = vmatprep.subr.bf16.mxu0 0
      %882 = vmatpush1.bf16.msra.mxu0 0
      %883 = vmatprep.subr.bf16.mxu0 0
      %884 = vmatpush1.bf16.msra.mxu0 0
      %885 = vmatprep.mubr.bf16.mxu0 0
      %886 = vmatmul.mubr.bf16.gmra.mrb[0].mxu0 %v779
      %v887 = vpop.f32.mrb[0].mxu0
      %v888 = vadd.f32 %v763, %v887
      %v889 = vpop.f32.mrb[0].mxu0
      %v890 = vpop.f32.mrb[0].mxu0
      %v891 = vadd.f32 %v763, %v890
      %v892 = vpop.f32.mrb[0].mxu0
      %893 = vmatprep.mubr.bf16.mxu0 0
      %894 = vmatmul.mubr.bf16.gmra.mrb[0].mxu0 %v782
      %v895 = vpop.f32.mrb[0].mxu0
      %v896 = vadd.f32 %v763, %v895
      %v897 = vpop.f32.mrb[0].mxu0
      %v898 = vpop.f32.mrb[0].mxu0
      %v899 = vadd.f32 %v763, %v898
      %v900 = vpop.f32.mrb[0].mxu0
      %901 = vmatprep.mubr.bf16.mxu0 0
      %902 = vmatmul.mubr.bf16.gmra.mrb[0].mxu0 %v785
      %v903 = vpop.f32.mrb[0].mxu0
      %v904 = vadd.f32 %v763, %v903
      %v905 = vpop.f32.mrb[0].mxu0
      %v906 = vpop.f32.mrb[0].mxu0
      %v907 = vadd.f32 %v763, %v906
      %v908 = vpop.f32.mrb[0].mxu0
      %909 = vmatprep.mubr.bf16.mxu0 0
      %910 = vmatmul.mubr.bf16.gmra.mrb[0].mxu0 %v788
      %v911 = vpop.f32.mrb[0].mxu0
      %v912 = vadd.f32 %v763, %v911
      %v913 = vpop.f32.mrb[0].mxu0
      %v914 = vpop.f32.mrb[0].mxu0
      %v915 = vadd.f32 %v763, %v914
      %v916 = vpop.f32.mrb[0].mxu0
      %917 = vmatprep.mubr.bf16.mxu0 0
      %918 = vmatmul.mubr.bf16.gmra.mrb[0].mxu0 %v791
      %v919 = vpop.f32.mrb[0].mxu0
      %v920 = vadd.f32 %v763, %v919
      %v921 = vpop.f32.mrb[0].mxu0
      %v922 = vpop.f32.mrb[0].mxu0
      %v923 = vadd.f32 %v763, %v922
      %v924 = vpop.f32.mrb[0].mxu0
      %925 = vmatprep.mubr.bf16.mxu0 0
      %926 = vmatmul.mubr.bf16.gmra.mrb[0].mxu0 %v794
      %v927 = vpop.f32.mrb[0].mxu0
      %v928 = vadd.f32 %v763, %v927
      %v929 = vpop.f32.mrb[0].mxu0
      %v930 = vpop.f32.mrb[0].mxu0
      %v931 = vadd.f32 %v763, %v930
      %v932 = vpop.f32.mrb[0].mxu0
      %933 = vmatprep.mubr.bf16.mxu0 0
      %934 = vmatmul.mubr.bf16.gmra.mrb[0].mxu0 %v797
      %v935 = vpop.f32.mrb[0].mxu0
      %v936 = vadd.f32 %v763, %v935
      %v937 = vpop.f32.mrb[0].mxu0
      %v938 = vpop.f32.mrb[0].mxu0
      %v939 = vadd.f32 %v763, %v938
      %v940 = vpop.f32.mrb[0].mxu0
      %941 = vmatprep.mubr.bf16.mxu0 0
      %942 = vmatmul.mubr.bf16.gmra.mrb[0].mxu0 %v800
      %v943 = vpop.f32.mrb[0].mxu0
      %v944 = vadd.f32 %v763, %v943
      %v945 = vpop.f32.mrb[0].mxu0
      %v946 = vpop.f32.mrb[0].mxu0
      %v947 = vadd.f32 %v763, %v946
      %v948 = vpop.f32.mrb[0].mxu0
      %949 = vmatprep.mubr.bf16.mxu0 0
      %950 = vmatmul.mubr.bf16.gmra.mrb[0].mxu0 %v803
      %v951 = vpop.f32.mrb[0].mxu0
      %v952 = vadd.f32 %v763, %v951
      %v953 = vpop.f32.mrb[0].mxu0
      %v954 = vpop.f32.mrb[0].mxu0
      %v955 = vadd.f32 %v763, %v954
      %v956 = vpop.f32.mrb[0].mxu0
      %957 = vmatprep.mubr.bf16.mxu0 0
      %958 = vmatmul.mubr.bf16.gmra.mrb[0].mxu0 %v806
      %v959 = vpop.f32.mrb[0].mxu0
      %v960 = vadd.f32 %v763, %v959
      %v961 = vpop.f32.mrb[0].mxu0
      %v962 = vpop.f32.mrb[0].mxu0
      %v963 = vadd.f32 %v763, %v962
      %v964 = vpop.f32.mrb[0].mxu0
      %965 = vmatprep.mubr.bf16.mxu0 0
      %966 = vmatmul.mubr.bf16.gmra.mrb[0].mxu0 %v809
      %v967 = vpop.f32.mrb[0].mxu0
      %v968 = vadd.f32 %v763, %v967
      %v969 = vpop.f32.mrb[0].mxu0
      %v970 = vpop.f32.mrb[0].mxu0
      %v971 = vadd.f32 %v763, %v970
      %v972 = vpop.f32.mrb[0].mxu0
      %973 = vmatprep.mubr.bf16.mxu0 0
      %974 = vmatmul.mubr.bf16.gmra.mrb[0].mxu0 %v812
      %v975 = vpop.f32.mrb[0].mxu0
      %v976 = vadd.f32 %v763, %v975
      %v977 = vpop.f32.mrb[0].mxu0
      %v978 = vpop.f32.mrb[0].mxu0
      %v979 = vadd.f32 %v763, %v978
      %v980 = vpop.f32.mrb[0].mxu0
      %981 = vmatprep.mubr.bf16.mxu0 0
      %982 = vmatmul.mubr.bf16.gmra.mrb[0].mxu0 %v815
      %v983 = vpop.f32.mrb[0].mxu0
      %v984 = vadd.f32 %v763, %v983
      %v985 = vpop.f32.mrb[0].mxu0
      %v986 = vpop.f32.mrb[0].mxu0
      %v987 = vadd.f32 %v763, %v986
      %v988 = vpop.f32.mrb[0].mxu0
      %989 = vmatprep.mubr.bf16.mxu0 0
      %990 = vmatmul.mubr.bf16.gmra.mrb[0].mxu0 %v818
      %v991 = vpop.f32.mrb[0].mxu0
      %v992 = vadd.f32 %v763, %v991
      %v993 = vpop.f32.mrb[0].mxu0
      %v994 = vpop.f32.mrb[0].mxu0
      %v995 = vadd.f32 %v763, %v994
      %v996 = vpop.f32.mrb[0].mxu0
      %997 = vmatprep.mubr.bf16.mxu0 0
      %998 = vmatmul.mubr.bf16.gmra.mrb[0].mxu0 %v821
      %v999 = vpop.f32.mrb[0].mxu0
      %v1000 = vadd.f32 %v763, %v999
      %v1001 = vpop.f32.mrb[0].mxu0
      %v1002 = vpop.f32.mrb[0].mxu0
      %v1003 = vadd.f32 %v763, %v1002
      %v1004 = vpop.f32.mrb[0].mxu0
      %1005 = vmatprep.mubr.bf16.mxu0 0
      %1006 = vmatmul.mubr.bf16.gmra.mrb[0].mxu0 %v824
      %v1007 = vpop.f32.mrb[0].mxu0
      %v1008 = vadd.f32 %v763, %v1007
      %v1009 = vpop.f32.mrb[0].mxu0
      %v1010 = vpop.f32.mrb[0].mxu0
      %v1011 = vadd.f32 %v763, %v1010
      %v1012 = vpop.f32.mrb[0].mxu0
      %1013 = vmatprep.mubr.bf16.mxu0 0
      %1014 = vmatmul.mubr.bf16.gmra.mrb[0].mxu0 %v827
      %v1015 = vpop.f32.mrb[0].mxu0
      %v1016 = vadd.f32 %v763, %v1015
      %v1017 = vpop.f32.mrb[0].mxu0
      %v1018 = vpop.f32.mrb[0].mxu0
      %v1019 = vadd.f32 %v763, %v1018
      %v1020 = vpop.f32.mrb[0].mxu0
      %1021 = vmatprep.mubr.bf16.mxu0 0
      %1022 = vmatmul.mubr.bf16.gmra.mrb[0].mxu0 %v830
      %v1023 = vpop.f32.mrb[0].mxu0
      %v1024 = vadd.f32 %v763, %v1023
      %v1025 = vpop.f32.mrb[0].mxu0
      %v1026 = vpop.f32.mrb[0].mxu0
      %v1027 = vadd.f32 %v763, %v1026
      %v1028 = vpop.f32.mrb[0].mxu0
      %1029 = vmatprep.mubr.bf16.mxu0 0
      %1030 = vmatmul.mubr.bf16.gmra.mrb[0].mxu0 %v833
      %v1031 = vpop.f32.mrb[0].mxu0
      %v1032 = vadd.f32 %v763, %v1031
      %v1033 = vpop.f32.mrb[0].mxu0
      %v1034 = vpop.f32.mrb[0].mxu0
      %v1035 = vadd.f32 %v763, %v1034
      %v1036 = vpop.f32.mrb[0].mxu0
      %1037 = vmatprep.mubr.bf16.mxu0 0
      %1038 = vmatmul.mubr.bf16.gmra.mrb[0].mxu0 %v836
      %v1039 = vpop.f32.mrb[0].mxu0
      %v1040 = vadd.f32 %v763, %v1039
      %v1041 = vpop.f32.mrb[0].mxu0
      %v1042 = vpop.f32.mrb[0].mxu0
      %v1043 = vadd.f32 %v763, %v1042
      %v1044 = vpop.f32.mrb[0].mxu0
      %1045 = vmatprep.mubr.bf16.mxu0 0
      %1046 = vmatmul.mubr.bf16.gmra.mrb[0].mxu0 %v839
      %v1047 = vpop.f32.mrb[0].mxu0
      %v1048 = vadd.f32 %v763, %v1047
      %v1049 = vpop.f32.mrb[0].mxu0
      %v1050 = vpop.f32.mrb[0].mxu0
      %v1051 = vadd.f32 %v763, %v1050
      %v1052 = vpop.f32.mrb[0].mxu0
      %1053 = vmatprep.mubr.bf16.mxu0 0
      %1054 = vmatmul.mubr.bf16.gmra.mrb[0].mxu0 %v842
      %v1055 = vpop.f32.mrb[0].mxu0
      %v1056 = vadd.f32 %v763, %v1055
      %v1057 = vpop.f32.mrb[0].mxu0
      %v1058 = vpop.f32.mrb[0].mxu0
      %v1059 = vadd.f32 %v763, %v1058
      %v1060 = vpop.f32.mrb[0].mxu0
      %1061 = vmatprep.mubr.bf16.mxu0 0
      %1062 = vmatmul.mubr.bf16.gmra.mrb[0].mxu0 %v845
      %v1063 = vpop.f32.mrb[0].mxu0
      %v1064 = vadd.f32 %v763, %v1063
      %v1065 = vpop.f32.mrb[0].mxu0
      %v1066 = vpop.f32.mrb[0].mxu0
      %v1067 = vadd.f32 %v763, %v1066
      %v1068 = vpop.f32.mrb[0].mxu0
      %1069 = vmatprep.mubr.bf16.mxu0 0
      %1070 = vmatmul.mubr.bf16.gmra.mrb[0].mxu0 %v848
      %v1071 = vpop.f32.mrb[0].mxu0
      %v1072 = vadd.f32 %v763, %v1071
      %v1073 = vpop.f32.mrb[0].mxu0
      %v1074 = vpop.f32.mrb[0].mxu0
      %v1075 = vadd.f32 %v763, %v1074
      %v1076 = vpop.f32.mrb[0].mxu0
      %1077 = vmatprep.mubr.bf16.mxu0 0
      %1078 = vmatmul.mubr.bf16.gmra.mrb[0].mxu0 %v851
      %v1079 = vpop.f32.mrb[0].mxu0
      %v1080 = vadd.f32 %v763, %v1079
      %v1081 = vpop.f32.mrb[0].mxu0
      %v1082 = vpop.f32.mrb[0].mxu0
      %v1083 = vpop.f32.mrb[0].mxu0
      %1084 = vdwg.mxu0
      %v1085 = vmax.f32 %v888, 0.0
      %v1086 = vmax.f32 %v891, 0.0
      %v1087 = vmax.f32 %v896, 0.0
      %v1088 = vmax.f32 %v899, 0.0
      %v1089 = vmax.f32 %v904, 0.0
      %v1090 = vmax.f32 %v907, 0.0
      %v1091 = vmax.f32 %v912, 0.0
      %v1092 = vmax.f32 %v915, 0.0
      %v1093 = vmax.f32 %v920, 0.0
      %v1094 = vmax.f32 %v923, 0.0
      %v1095 = vmax.f32 %v928, 0.0
      %v1096 = vmax.f32 %v931, 0.0
      %v1097 = vmax.f32 %v936, 0.0
      %v1098 = vmax.f32 %v939, 0.0
      %v1099 = vmax.f32 %v944, 0.0
      %v1100 = vmax.f32 %v947, 0.0
      %v1101 = vmax.f32 %v952, 0.0
      %v1102 = vmax.f32 %v955, 0.0
      %v1103 = vmax.f32 %v960, 0.0
      %v1104 = vmax.f32 %v963, 0.0
      %v1105 = vmax.f32 %v968, 0.0
      %v1106 = vmax.f32 %v971, 0.0
      %v1107 = vmax.f32 %v976, 0.0
      %v1108 = vmax.f32 %v979, 0.0
      %v1109 = vmax.f32 %v984, 0.0
      %v1110 = vmax.f32 %v987, 0.0
      %v1111 = vmax.f32 %v992, 0.0
      %v1112 = vmax.f32 %v995, 0.0
      %v1113 = vmax.f32 %v1000, 0.0
      %v1114 = vmax.f32 %v1003, 0.0
      %v1115 = vmax.f32 %v1008, 0.0
      %v1116 = vmax.f32 %v1011, 0.0
      %v1117 = vmax.f32 %v1016, 0.0
      %v1118 = vmax.f32 %v1019, 0.0
      %v1119 = vmax.f32 %v1024, 0.0
      %v1120 = vmax.f32 %v1027, 0.0
      %v1121 = vmax.f32 %v1032, 0.0
      %v1122 = vmax.f32 %v1035, 0.0
      %v1123 = vmax.f32 %v1040, 0.0
      %v1124 = vmax.f32 %v1043, 0.0
      %v1125 = vmax.f32 %v1048, 0.0
      %v1126 = vmax.f32 %v1051, 0.0
      %v1127 = vmax.f32 %v1056, 0.0
      %v1128 = vmax.f32 %v1059, 0.0
      %v1129 = vmax.f32 %v1064, 0.0
      %v1130 = vmax.f32 %v1067, 0.0
      %v1131 = vmax.f32 %v1072, 0.0
      %v1132 = vmax.f32 %v1075, 0.0
      %v1133 = vmax.f32 %v1080, 0.0
      %v1134 = vpack.c.bf16 %v1086, %v1085
      %v1135 = vpack.c.bf16 %v1088, %v1087
      %v1136 = vpack.c.bf16 %v1090, %v1089
      %v1137 = vpack.c.bf16 %v1092, %v1091
      %v1138 = vpack.c.bf16 %v1094, %v1093
      %v1139 = vpack.c.bf16 %v1096, %v1095
      %v1140 = vpack.c.bf16 %v1098, %v1097
      %v1141 = vpack.c.bf16 %v1100, %v1099
      %v1142 = vpack.c.bf16 %v1102, %v1101
      %v1143 = vpack.c.bf16 %v1104, %v1103
      %v1144 = vpack.c.bf16 %v1106, %v1105
      %v1145 = vpack.c.bf16 %v1108, %v1107
      %v1146 = vpack.c.bf16 %v1110, %v1109
      %v1147 = vpack.c.bf16 %v1112, %v1111
      %v1148 = vpack.c.bf16 %v1114, %v1113
      %v1149 = vpack.c.bf16 %v1116, %v1115
      %v1150 = vpack.c.bf16 %v1118, %v1117
      %v1151 = vpack.c.bf16 %v1120, %v1119
      %v1152 = vpack.c.bf16 %v1122, %v1121
      %v1153 = vpack.c.bf16 %v1124, %v1123
      %v1154 = vpack.c.bf16 %v1126, %v1125
      %v1155 = vpack.c.bf16 %v1128, %v1127
      %v1156 = vpack.c.bf16 %v1130, %v1129
      %v1157 = vpack.c.bf16 %v1132, %v1131
      %v1158 = vpack.c.bf16 %v1133, %v1133
      %v1159 = vld [vmem:[%s5] sm:$0xf]
      %v1160 = vld [vmem:[%s5 + $0x4] sm:$0xf]
      %v1161 = vld [vmem:[%s5 + $0x8] sm:$0xf]
      %v1162 = vld [vmem:[%s5 + $0xc] sm:$0xf]
      %v1163 = vld [vmem:[%s6] sm:$0x1]
      %v1165 = vlaneseq
      %v1166 = vshrl.u32 %v1165, 7
      %v1167 = vsub.s32 0, %v1166
      %v1168 = vrot.slane %v1163, %v1167
      %v1174 = vunpack.c.l.b16 %v1159
      %v1175 = vunpack.c.l.b16 %v1160
      %v1176 = vunpack.c.l.b16 %v1161
      %v1177 = vunpack.c.l.b16 %v1162
      %v1178 = vpack.c.b16 %v1175, %v1174
      %v1179 = vpack.c.b16 %v1177, %v1176
      %v1183 = vsel %vm777, %v1134, 0
      %v1186 = vsel %vm777, %v1135, 0
      %v1189 = vsel %vm777, %v1136, 0
      %v1192 = vsel %vm777, %v1137, 0
      %v1195 = vsel %vm777, %v1138, 0
      %v1198 = vsel %vm777, %v1139, 0
      %v1201 = vsel %vm777, %v1140, 0
      %v1204 = vsel %vm777, %v1141, 0
      %v1207 = vsel %vm777, %v1142, 0
      %v1210 = vsel %vm777, %v1143, 0
      %v1213 = vsel %vm777, %v1144, 0
      %v1216 = vsel %vm777, %v1145, 0
      %v1219 = vsel %vm777, %v1146, 0
      %v1222 = vsel %vm777, %v1147, 0
      %v1225 = vsel %vm777, %v1148, 0
      %v1228 = vsel %vm777, %v1149, 0
      %v1231 = vsel %vm777, %v1150, 0
      %v1234 = vsel %vm777, %v1151, 0
      %v1237 = vsel %vm777, %v1152, 0
      %v1240 = vsel %vm777, %v1153, 0
      %v1243 = vsel %vm777, %v1154, 0
      %v1246 = vsel %vm777, %v1155, 0
      %v1249 = vsel %vm777, %v1156, 0
      %v1252 = vsel %vm777, %v1157, 0
      %v1255 = vsel %vm777, %v1158, 0
      %1257 = vmatprep.subr.bf16.mxu0 0
      %1258 = vmatpush1.bf16.msra.mxu0 %v1178
      %1259 = vmatprep.subr.bf16.mxu0 0
      %1260 = vmatpush1.bf16.msra.mxu0 %v1179
      %1261 = vmatprep.subr.bf16.mxu0 0
      %1262 = vmatpush1.bf16.msra.mxu0 0
      %1263 = vmatprep.subr.bf16.mxu0 0
      %1264 = vmatpush1.bf16.msra.mxu0 0
      %1265 = vmatprep.subr.bf16.mxu0 0
      %1266 = vmatpush1.bf16.msra.mxu0 0
      %1267 = vmatprep.subr.bf16.mxu0 0
      %1268 = vmatpush1.bf16.msra.mxu0 0
      %1269 = vmatprep.subr.bf16.mxu0 0
      %1270 = vmatpush1.bf16.msra.mxu0 0
      %1271 = vmatprep.subr.bf16.mxu0 0
      %1272 = vmatpush1.bf16.msra.mxu0 0
      %1273 = vmatprep.subr.bf16.mxu0 0
      %1274 = vmatpush1.bf16.msra.mxu0 0
      %1275 = vmatprep.subr.bf16.mxu0 0
      %1276 = vmatpush1.bf16.msra.mxu0 0
      %1277 = vmatprep.subr.bf16.mxu0 0
      %1278 = vmatpush1.bf16.msra.mxu0 0
      %1279 = vmatprep.subr.bf16.mxu0 0
      %1280 = vmatpush1.bf16.msra.mxu0 0
      %1281 = vmatprep.subr.bf16.mxu0 0
      %1282 = vmatpush1.bf16.msra.mxu0 0
      %1283 = vmatprep.subr.bf16.mxu0 0
      %1284 = vmatpush1.bf16.msra.mxu0 0
      %1285 = vmatprep.subr.bf16.mxu0 0
      %1286 = vmatpush1.bf16.msra.mxu0 0
      %1287 = vmatprep.subr.bf16.mxu0 0
      %1288 = vmatpush1.bf16.msra.mxu0 0
      %1289 = vmatprep.mubr.bf16.mxu0 0
      %1290 = vmatmul.mubr.bf16.gmra.mrb[0].mxu0 %v1183
      %v1291 = vpop.f32.mrb[0].mxu0
      %v1292 = vadd.f32 %v1168, %v1291
      %v1293 = vpop.f32.mrb[0].mxu0
      %v1294 = vpop.f32.mrb[0].mxu0
      %v1295 = vadd.f32 %v1168, %v1294
      %v1296 = vpop.f32.mrb[0].mxu0
      %1297 = vmatprep.mubr.bf16.mxu0 0
      %1298 = vmatmul.mubr.bf16.gmra.mrb[0].mxu0 %v1186
      %v1299 = vpop.f32.mrb[0].mxu0
      %v1300 = vadd.f32 %v1168, %v1299
      %v1301 = vpop.f32.mrb[0].mxu0
      %v1302 = vpop.f32.mrb[0].mxu0
      %v1303 = vadd.f32 %v1168, %v1302
      %v1304 = vpop.f32.mrb[0].mxu0
      %1305 = vmatprep.mubr.bf16.mxu0 0
      %1306 = vmatmul.mubr.bf16.gmra.mrb[0].mxu0 %v1189
      %v1307 = vpop.f32.mrb[0].mxu0
      %v1308 = vadd.f32 %v1168, %v1307
      %v1309 = vpop.f32.mrb[0].mxu0
      %v1310 = vpop.f32.mrb[0].mxu0
      %v1311 = vadd.f32 %v1168, %v1310
      %v1312 = vpop.f32.mrb[0].mxu0
      %1313 = vmatprep.mubr.bf16.mxu0 0
      %1314 = vmatmul.mubr.bf16.gmra.mrb[0].mxu0 %v1192
      %v1315 = vpop.f32.mrb[0].mxu0
      %v1316 = vadd.f32 %v1168, %v1315
      %v1317 = vpop.f32.mrb[0].mxu0
      %v1318 = vpop.f32.mrb[0].mxu0
      %v1319 = vadd.f32 %v1168, %v1318
      %v1320 = vpop.f32.mrb[0].mxu0
      %1321 = vmatprep.mubr.bf16.mxu0 0
      %1322 = vmatmul.mubr.bf16.gmra.mrb[0].mxu0 %v1195
      %v1323 = vpop.f32.mrb[0].mxu0
      %v1324 = vadd.f32 %v1168, %v1323
      %v1325 = vpop.f32.mrb[0].mxu0
      %v1326 = vpop.f32.mrb[0].mxu0
      %v1327 = vadd.f32 %v1168, %v1326
      %v1328 = vpop.f32.mrb[0].mxu0
      %1329 = vmatprep.mubr.bf16.mxu0 0
      %1330 = vmatmul.mubr.bf16.gmra.mrb[0].mxu0 %v1198
      %v1331 = vpop.f32.mrb[0].mxu0
      %v1332 = vadd.f32 %v1168, %v1331
      %v1333 = vpop.f32.mrb[0].mxu0
      %v1334 = vpop.f32.mrb[0].mxu0
      %v1335 = vadd.f32 %v1168, %v1334
      %v1336 = vpop.f32.mrb[0].mxu0
      %1337 = vmatprep.mubr.bf16.mxu0 0
      %1338 = vmatmul.mubr.bf16.gmra.mrb[0].mxu0 %v1201
      %v1339 = vpop.f32.mrb[0].mxu0
      %v1340 = vadd.f32 %v1168, %v1339
      %v1341 = vpop.f32.mrb[0].mxu0
      %v1342 = vpop.f32.mrb[0].mxu0
      %v1343 = vadd.f32 %v1168, %v1342
      %v1344 = vpop.f32.mrb[0].mxu0
      %1345 = vmatprep.mubr.bf16.mxu0 0
      %1346 = vmatmul.mubr.bf16.gmra.mrb[0].mxu0 %v1204
      %v1347 = vpop.f32.mrb[0].mxu0
      %v1348 = vadd.f32 %v1168, %v1347
      %v1349 = vpop.f32.mrb[0].mxu0
      %v1350 = vpop.f32.mrb[0].mxu0
      %v1351 = vadd.f32 %v1168, %v1350
      %v1352 = vpop.f32.mrb[0].mxu0
      %1353 = vmatprep.mubr.bf16.mxu0 0
      %1354 = vmatmul.mubr.bf16.gmra.mrb[0].mxu0 %v1207
      %v1355 = vpop.f32.mrb[0].mxu0
      %v1356 = vadd.f32 %v1168, %v1355
      %v1357 = vpop.f32.mrb[0].mxu0
      %v1358 = vpop.f32.mrb[0].mxu0
      %v1359 = vadd.f32 %v1168, %v1358
      %v1360 = vpop.f32.mrb[0].mxu0
      %1361 = vmatprep.mubr.bf16.mxu0 0
      %1362 = vmatmul.mubr.bf16.gmra.mrb[0].mxu0 %v1210
      %v1363 = vpop.f32.mrb[0].mxu0
      %v1364 = vadd.f32 %v1168, %v1363
      %v1365 = vpop.f32.mrb[0].mxu0
      %v1366 = vpop.f32.mrb[0].mxu0
      %v1367 = vadd.f32 %v1168, %v1366
      %v1368 = vpop.f32.mrb[0].mxu0
      %1369 = vmatprep.mubr.bf16.mxu0 0
      %1370 = vmatmul.mubr.bf16.gmra.mrb[0].mxu0 %v1213
      %v1371 = vpop.f32.mrb[0].mxu0
      %v1372 = vadd.f32 %v1168, %v1371
      %v1373 = vpop.f32.mrb[0].mxu0
      %v1374 = vpop.f32.mrb[0].mxu0
      %v1375 = vadd.f32 %v1168, %v1374
      %v1376 = vpop.f32.mrb[0].mxu0
      %1377 = vmatprep.mubr.bf16.mxu0 0
      %1378 = vmatmul.mubr.bf16.gmra.mrb[0].mxu0 %v1216
      %v1379 = vpop.f32.mrb[0].mxu0
      %v1380 = vadd.f32 %v1168, %v1379
      %v1381 = vpop.f32.mrb[0].mxu0
      %v1382 = vpop.f32.mrb[0].mxu0
      %v1383 = vadd.f32 %v1168, %v1382
      %v1384 = vpop.f32.mrb[0].mxu0
      %1385 = vmatprep.mubr.bf16.mxu0 0
      %1386 = vmatmul.mubr.bf16.gmra.mrb[0].mxu0 %v1219
      %v1387 = vpop.f32.mrb[0].mxu0
      %v1388 = vadd.f32 %v1168, %v1387
      %v1389 = vpop.f32.mrb[0].mxu0
      %v1390 = vpop.f32.mrb[0].mxu0
      %v1391 = vadd.f32 %v1168, %v1390
      %v1392 = vpop.f32.mrb[0].mxu0
      %1393 = vmatprep.mubr.bf16.mxu0 0
      %1394 = vmatmul.mubr.bf16.gmra.mrb[0].mxu0 %v1222
      %v1395 = vpop.f32.mrb[0].mxu0
      %v1396 = vadd.f32 %v1168, %v1395
      %v1397 = vpop.f32.mrb[0].mxu0
      %v1398 = vpop.f32.mrb[0].mxu0
      %v1399 = vadd.f32 %v1168, %v1398
      %v1400 = vpop.f32.mrb[0].mxu0
      %1401 = vmatprep.mubr.bf16.mxu0 0
      %1402 = vmatmul.mubr.bf16.gmra.mrb[0].mxu0 %v1225
      %v1403 = vpop.f32.mrb[0].mxu0
      %v1404 = vadd.f32 %v1168, %v1403
      %v1405 = vpop.f32.mrb[0].mxu0
      %v1406 = vpop.f32.mrb[0].mxu0
      %v1407 = vadd.f32 %v1168, %v1406
      %v1408 = vpop.f32.mrb[0].mxu0
      %1409 = vmatprep.mubr.bf16.mxu0 0
      %1410 = vmatmul.mubr.bf16.gmra.mrb[0].mxu0 %v1228
      %v1411 = vpop.f32.mrb[0].mxu0
      %v1412 = vadd.f32 %v1168, %v1411
      %v1413 = vpop.f32.mrb[0].mxu0
      %v1414 = vpop.f32.mrb[0].mxu0
      %v1415 = vadd.f32 %v1168, %v1414
      %v1416 = vpop.f32.mrb[0].mxu0
      %1417 = vmatprep.mubr.bf16.mxu0 0
      %1418 = vmatmul.mubr.bf16.gmra.mrb[0].mxu0 %v1231
      %v1419 = vpop.f32.mrb[0].mxu0
      %v1420 = vadd.f32 %v1168, %v1419
      %v1421 = vpop.f32.mrb[0].mxu0
      %v1422 = vpop.f32.mrb[0].mxu0
      %v1423 = vadd.f32 %v1168, %v1422
      %v1424 = vpop.f32.mrb[0].mxu0
      %1425 = vmatprep.mubr.bf16.mxu0 0
      %1426 = vmatmul.mubr.bf16.gmra.mrb[0].mxu0 %v1234
      %v1427 = vpop.f32.mrb[0].mxu0
      %v1428 = vadd.f32 %v1168, %v1427
      %v1429 = vpop.f32.mrb[0].mxu0
      %v1430 = vpop.f32.mrb[0].mxu0
      %v1431 = vadd.f32 %v1168, %v1430
      %v1432 = vpop.f32.mrb[0].mxu0
      %1433 = vmatprep.mubr.bf16.mxu0 0
      %1434 = vmatmul.mubr.bf16.gmra.mrb[0].mxu0 %v1237
      %v1435 = vpop.f32.mrb[0].mxu0
      %v1436 = vadd.f32 %v1168, %v1435
      %v1437 = vpop.f32.mrb[0].mxu0
      %v1438 = vpop.f32.mrb[0].mxu0
      %v1439 = vadd.f32 %v1168, %v1438
      %v1440 = vpop.f32.mrb[0].mxu0
      %1441 = vmatprep.mubr.bf16.mxu0 0
      %1442 = vmatmul.mubr.bf16.gmra.mrb[0].mxu0 %v1240
      %v1443 = vpop.f32.mrb[0].mxu0
      %v1444 = vadd.f32 %v1168, %v1443
      %v1445 = vpop.f32.mrb[0].mxu0
      %v1446 = vpop.f32.mrb[0].mxu0
      %v1447 = vadd.f32 %v1168, %v1446
      %v1448 = vpop.f32.mrb[0].mxu0
      %1449 = vmatprep.mubr.bf16.mxu0 0
      %1450 = vmatmul.mubr.bf16.gmra.mrb[0].mxu0 %v1243
      %v1451 = vpop.f32.mrb[0].mxu0
      %v1452 = vadd.f32 %v1168, %v1451
      %v1453 = vpop.f32.mrb[0].mxu0
      %v1454 = vpop.f32.mrb[0].mxu0
      %v1455 = vadd.f32 %v1168, %v1454
      %v1456 = vpop.f32.mrb[0].mxu0
      %1457 = vmatprep.mubr.bf16.mxu0 0
      %1458 = vmatmul.mubr.bf16.gmra.mrb[0].mxu0 %v1246
      %v1459 = vpop.f32.mrb[0].mxu0
      %v1460 = vadd.f32 %v1168, %v1459
      %v1461 = vpop.f32.mrb[0].mxu0
      %v1462 = vpop.f32.mrb[0].mxu0
      %v1463 = vadd.f32 %v1168, %v1462
      %v1464 = vpop.f32.mrb[0].mxu0
      %1465 = vmatprep.mubr.bf16.mxu0 0
      %1466 = vmatmul.mubr.bf16.gmra.mrb[0].mxu0 %v1249
      %v1467 = vpop.f32.mrb[0].mxu0
      %v1468 = vadd.f32 %v1168, %v1467
      %v1469 = vpop.f32.mrb[0].mxu0
      %v1470 = vpop.f32.mrb[0].mxu0
      %v1471 = vadd.f32 %v1168, %v1470
      %v1472 = vpop.f32.mrb[0].mxu0
      %1473 = vmatprep.mubr.bf16.mxu0 0
      %1474 = vmatmul.mubr.bf16.gmra.mrb[0].mxu0 %v1252
      %v1475 = vpop.f32.mrb[0].mxu0
      %v1476 = vadd.f32 %v1168, %v1475
      %v1477 = vpop.f32.mrb[0].mxu0
      %v1478 = vpop.f32.mrb[0].mxu0
      %v1479 = vadd.f32 %v1168, %v1478
      %v1480 = vpop.f32.mrb[0].mxu0
      %1481 = vmatprep.mubr.bf16.mxu0 0
      %1482 = vmatmul.mubr.bf16.gmra.mrb[0].mxu0 %v1255
      %v1483 = vpop.f32.mrb[0].mxu0
      %v1484 = vadd.f32 %v1168, %v1483
      %v1485 = vpop.f32.mrb[0].mxu0
      %v1486 = vpop.f32.mrb[0].mxu0
      %v1487 = vpop.f32.mrb[0].mxu0
      %1488 = vdwg.mxu0
      %v1489 = vxor.u32 %v1292, 2147483648
      %v1490 = vxor.u32 %v1295, 2147483648
      %v1491 = vxor.u32 %v1300, 2147483648
      %v1492 = vxor.u32 %v1303, 2147483648
      %v1493 = vxor.u32 %v1308, 2147483648
      %v1494 = vxor.u32 %v1311, 2147483648
      %v1495 = vxor.u32 %v1316, 2147483648
      %v1496 = vxor.u32 %v1319, 2147483648
      %v1497 = vxor.u32 %v1324, 2147483648
      %v1498 = vxor.u32 %v1327, 2147483648
      %v1499 = vxor.u32 %v1332, 2147483648
      %v1500 = vxor.u32 %v1335, 2147483648
      %v1501 = vxor.u32 %v1340, 2147483648
      %v1502 = vxor.u32 %v1343, 2147483648
      %v1503 = vxor.u32 %v1348, 2147483648
      %v1504 = vxor.u32 %v1351, 2147483648
      %v1505 = vxor.u32 %v1356, 2147483648
      %v1506 = vxor.u32 %v1359, 2147483648
      %v1507 = vxor.u32 %v1364, 2147483648
      %v1508 = vxor.u32 %v1367, 2147483648
      %v1509 = vxor.u32 %v1372, 2147483648
      %v1510 = vxor.u32 %v1375, 2147483648
      %v1511 = vxor.u32 %v1380, 2147483648
      %v1512 = vxor.u32 %v1383, 2147483648
      %v1513 = vxor.u32 %v1388, 2147483648
      %v1514 = vxor.u32 %v1391, 2147483648
      %v1515 = vxor.u32 %v1396, 2147483648
      %v1516 = vxor.u32 %v1399, 2147483648
      %v1517 = vxor.u32 %v1404, 2147483648
      %v1518 = vxor.u32 %v1407, 2147483648
      %v1519 = vxor.u32 %v1412, 2147483648
      %v1520 = vxor.u32 %v1415, 2147483648
      %v1521 = vxor.u32 %v1420, 2147483648
      %v1522 = vxor.u32 %v1423, 2147483648
      %v1523 = vxor.u32 %v1428, 2147483648
      %v1524 = vxor.u32 %v1431, 2147483648
      %v1525 = vxor.u32 %v1436, 2147483648
      %v1526 = vxor.u32 %v1439, 2147483648
      %v1527 = vxor.u32 %v1444, 2147483648
      %v1528 = vxor.u32 %v1447, 2147483648
      %v1529 = vxor.u32 %v1452, 2147483648
      %v1530 = vxor.u32 %v1455, 2147483648
      %v1531 = vxor.u32 %v1460, 2147483648
      %v1532 = vxor.u32 %v1463, 2147483648
      %v1533 = vxor.u32 %v1468, 2147483648
      %v1534 = vxor.u32 %v1471, 2147483648
      %v1535 = vxor.u32 %v1476, 2147483648
      %v1536 = vxor.u32 %v1479, 2147483648
      %v1537 = vxor.u32 %v1484, 2147483648
      %v1538 = vmul.f32 %v1489, 1.442695
      %v1539 = vpow.pop %v1538
      %v1540 = vmul.f32 %v1490, 1.442695
      %v1541 = vpow.pop %v1540
      %v1542 = vmul.f32 %v1491, 1.442695
      %v1543 = vpow.pop %v1542
      %v1544 = vmul.f32 %v1492, 1.442695
      %v1545 = vpow.pop %v1544
      %v1546 = vmul.f32 %v1493, 1.442695
      %v1547 = vpow.pop %v1546
      %v1548 = vmul.f32 %v1494, 1.442695
      %v1549 = vpow.pop %v1548
      %v1550 = vmul.f32 %v1495, 1.442695
      %v1551 = vpow.pop %v1550
      %v1552 = vmul.f32 %v1496, 1.442695
      %v1553 = vpow.pop %v1552
      %v1554 = vmul.f32 %v1497, 1.442695
      %v1555 = vpow.pop %v1554
      %v1556 = vmul.f32 %v1498, 1.442695
      %v1557 = vpow.pop %v1556
      %v1558 = vmul.f32 %v1499, 1.442695
      %v1559 = vpow.pop %v1558
      %v1560 = vmul.f32 %v1500, 1.442695
      %v1561 = vpow.pop %v1560
      %v1562 = vmul.f32 %v1501, 1.442695
      %v1563 = vpow.pop %v1562
      %v1564 = vmul.f32 %v1502, 1.442695
      %v1565 = vpow.pop %v1564
      %v1566 = vmul.f32 %v1503, 1.442695
      %v1567 = vpow.pop %v1566
      %v1568 = vmul.f32 %v1504, 1.442695
      %v1569 = vpow.pop %v1568
      %v1570 = vmul.f32 %v1505, 1.442695
      %v1571 = vpow.pop %v1570
      %v1572 = vmul.f32 %v1506, 1.442695
      %v1573 = vpow.pop %v1572
      %v1574 = vmul.f32 %v1507, 1.442695
      %v1575 = vpow.pop %v1574
      %v1576 = vmul.f32 %v1508, 1.442695
      %v1577 = vpow.pop %v1576
      %v1578 = vmul.f32 %v1509, 1.442695
      %v1579 = vpow.pop %v1578
      %v1580 = vmul.f32 %v1510, 1.442695
      %v1581 = vpow.pop %v1580
      %v1582 = vmul.f32 %v1511, 1.442695
      %v1583 = vpow.pop %v1582
      %v1584 = vmul.f32 %v1512, 1.442695
      %v1585 = vpow.pop %v1584
      %v1586 = vmul.f32 %v1513, 1.442695
      %v1587 = vpow.pop %v1586
      %v1588 = vmul.f32 %v1514, 1.442695
      %v1589 = vpow.pop %v1588
      %v1590 = vmul.f32 %v1515, 1.442695
      %v1591 = vpow.pop %v1590
      %v1592 = vmul.f32 %v1516, 1.442695
      %v1593 = vpow.pop %v1592
      %v1594 = vmul.f32 %v1517, 1.442695
      %v1595 = vpow.pop %v1594
      %v1596 = vmul.f32 %v1518, 1.442695
      %v1597 = vpow.pop %v1596
      %v1598 = vmul.f32 %v1519, 1.442695
      %v1599 = vpow.pop %v1598
      %v1600 = vmul.f32 %v1520, 1.442695
      %v1601 = vpow.pop %v1600
      %v1602 = vmul.f32 %v1521, 1.442695
      %v1603 = vpow.pop %v1602
      %v1604 = vmul.f32 %v1522, 1.442695
      %v1605 = vpow.pop %v1604
      %v1606 = vmul.f32 %v1523, 1.442695
      %v1607 = vpow.pop %v1606
      %v1608 = vmul.f32 %v1524, 1.442695
      %v1609 = vpow.pop %v1608
      %v1610 = vmul.f32 %v1525, 1.442695
      %v1611 = vpow.pop %v1610
      %v1612 = vmul.f32 %v1526, 1.442695
      %v1613 = vpow.pop %v1612
      %v1614 = vmul.f32 %v1527, 1.442695
      %v1615 = vpow.pop %v1614
      %v1616 = vmul.f32 %v1528, 1.442695
      %v1617 = vpow.pop %v1616
      %v1618 = vmul.f32 %v1529, 1.442695
      %v1619 = vpow.pop %v1618
      %v1620 = vmul.f32 %v1530, 1.442695
      %v1621 = vpow.pop %v1620
      %v1622 = vmul.f32 %v1531, 1.442695
      %v1623 = vpow.pop %v1622
      %v1624 = vmul.f32 %v1532, 1.442695
      %v1625 = vpow.pop %v1624
      %v1626 = vmul.f32 %v1533, 1.442695
      %v1627 = vpow.pop %v1626
      %v1628 = vmul.f32 %v1534, 1.442695
      %v1629 = vpow.pop %v1628
      %v1630 = vmul.f32 %v1535, 1.442695
      %v1631 = vpow.pop %v1630
      %v1632 = vmul.f32 %v1536, 1.442695
      %v1633 = vpow.pop %v1632
      %v1634 = vmul.f32 %v1537, 1.442695
      %v1635 = vpow.pop %v1634
      %v1636 = vadd.f32 %v1539, 1.0
      %v1637 = vadd.f32 %v1541, 1.0
      %v1638 = vadd.f32 %v1543, 1.0
      %v1639 = vadd.f32 %v1545, 1.0
      %v1640 = vadd.f32 %v1547, 1.0
      %v1641 = vadd.f32 %v1549, 1.0
      %v1642 = vadd.f32 %v1551, 1.0
      %v1643 = vadd.f32 %v1553, 1.0
      %v1644 = vadd.f32 %v1555, 1.0
      %v1645 = vadd.f32 %v1557, 1.0
      %v1646 = vadd.f32 %v1559, 1.0
      %v1647 = vadd.f32 %v1561, 1.0
      %v1648 = vadd.f32 %v1563, 1.0
      %v1649 = vadd.f32 %v1565, 1.0
      %v1650 = vadd.f32 %v1567, 1.0
      %v1651 = vadd.f32 %v1569, 1.0
      %v1652 = vadd.f32 %v1571, 1.0
      %v1653 = vadd.f32 %v1573, 1.0
      %v1654 = vadd.f32 %v1575, 1.0
      %v1655 = vadd.f32 %v1577, 1.0
      %v1656 = vadd.f32 %v1579, 1.0
      %v1657 = vadd.f32 %v1581, 1.0
      %v1658 = vadd.f32 %v1583, 1.0
      %v1659 = vadd.f32 %v1585, 1.0
      %v1660 = vadd.f32 %v1587, 1.0
      %v1661 = vadd.f32 %v1589, 1.0
      %v1662 = vadd.f32 %v1591, 1.0
      %v1663 = vadd.f32 %v1593, 1.0
      %v1664 = vadd.f32 %v1595, 1.0
      %v1665 = vadd.f32 %v1597, 1.0
      %v1666 = vadd.f32 %v1599, 1.0
      %v1667 = vadd.f32 %v1601, 1.0
      %v1668 = vadd.f32 %v1603, 1.0
      %v1669 = vadd.f32 %v1605, 1.0
      %v1670 = vadd.f32 %v1607, 1.0
      %v1671 = vadd.f32 %v1609, 1.0
      %v1672 = vadd.f32 %v1611, 1.0
      %v1673 = vadd.f32 %v1613, 1.0
      %v1674 = vadd.f32 %v1615, 1.0
      %v1675 = vadd.f32 %v1617, 1.0
      %v1676 = vadd.f32 %v1619, 1.0
      %v1677 = vadd.f32 %v1621, 1.0
      %v1678 = vadd.f32 %v1623, 1.0
      %v1679 = vadd.f32 %v1625, 1.0
      %v1680 = vadd.f32 %v1627, 1.0
      %v1681 = vadd.f32 %v1629, 1.0
      %v1682 = vadd.f32 %v1631, 1.0
      %v1683 = vadd.f32 %v1633, 1.0
      %v1684 = vadd.f32 %v1635, 1.0
      %v1685 = vrcp.pop %v1636
      %v1686 = vmul.f32 1.0, %v1685
      %v1687 = vrcp.pop %v1637
      %v1688 = vmul.f32 1.0, %v1687
      %v1689 = vrcp.pop %v1638
      %v1690 = vmul.f32 1.0, %v1689
      %v1691 = vrcp.pop %v1639
      %v1692 = vmul.f32 1.0, %v1691
      %v1693 = vrcp.pop %v1640
      %v1694 = vmul.f32 1.0, %v1693
      %v1695 = vrcp.pop %v1641
      %v1696 = vmul.f32 1.0, %v1695
      %v1697 = vrcp.pop %v1642
      %v1698 = vmul.f32 1.0, %v1697
      %v1699 = vrcp.pop %v1643
      %v1700 = vmul.f32 1.0, %v1699
      %v1701 = vrcp.pop %v1644
      %v1702 = vmul.f32 1.0, %v1701
      %v1703 = vrcp.pop %v1645
      %v1704 = vmul.f32 1.0, %v1703
      %v1705 = vrcp.pop %v1646
      %v1706 = vmul.f32 1.0, %v1705
      %v1707 = vrcp.pop %v1647
      %v1708 = vmul.f32 1.0, %v1707
      %v1709 = vrcp.pop %v1648
      %v1710 = vmul.f32 1.0, %v1709
      %v1711 = vrcp.pop %v1649
      %v1712 = vmul.f32 1.0, %v1711
      %v1713 = vrcp.pop %v1650
      %v1714 = vmul.f32 1.0, %v1713
      %v1715 = vrcp.pop %v1651
      %v1716 = vmul.f32 1.0, %v1715
      %v1717 = vrcp.pop %v1652
      %v1718 = vmul.f32 1.0, %v1717
      %v1719 = vrcp.pop %v1653
      %v1720 = vmul.f32 1.0, %v1719
      %v1721 = vrcp.pop %v1654
      %v1722 = vmul.f32 1.0, %v1721
      %v1723 = vrcp.pop %v1655
      %v1724 = vmul.f32 1.0, %v1723
      %v1725 = vrcp.pop %v1656
      %v1726 = vmul.f32 1.0, %v1725
      %v1727 = vrcp.pop %v1657
      %v1728 = vmul.f32 1.0, %v1727
      %v1729 = vrcp.pop %v1658
      %v1730 = vmul.f32 1.0, %v1729
      %v1731 = vrcp.pop %v1659
      %v1732 = vmul.f32 1.0, %v1731
      %v1733 = vrcp.pop %v1660
      %v1734 = vmul.f32 1.0, %v1733
      %v1735 = vrcp.pop %v1661
      %v1736 = vmul.f32 1.0, %v1735
      %v1737 = vrcp.pop %v1662
      %v1738 = vmul.f32 1.0, %v1737
      %v1739 = vrcp.pop %v1663
      %v1740 = vmul.f32 1.0, %v1739
      %v1741 = vrcp.pop %v1664
      %v1742 = vmul.f32 1.0, %v1741
      %v1743 = vrcp.pop %v1665
      %v1744 = vmul.f32 1.0, %v1743
      %v1745 = vrcp.pop %v1666
      %v1746 = vmul.f32 1.0, %v1745
      %v1747 = vrcp.pop %v1667
      %v1748 = vmul.f32 1.0, %v1747
      %v1749 = vrcp.pop %v1668
      %v1750 = vmul.f32 1.0, %v1749
      %v1751 = vrcp.pop %v1669
      %v1752 = vmul.f32 1.0, %v1751
      %v1753 = vrcp.pop %v1670
      %v1754 = vmul.f32 1.0, %v1753
      %v1755 = vrcp.pop %v1671
      %v1756 = vmul.f32 1.0, %v1755
      %v1757 = vrcp.pop %v1672
      %v1758 = vmul.f32 1.0, %v1757
      %v1759 = vrcp.pop %v1673
      %v1760 = vmul.f32 1.0, %v1759
      %v1761 = vrcp.pop %v1674
      %v1762 = vmul.f32 1.0, %v1761
      %v1763 = vrcp.pop %v1675
      %v1764 = vmul.f32 1.0, %v1763
      %v1765 = vrcp.pop %v1676
      %v1766 = vmul.f32 1.0, %v1765
      %v1767 = vrcp.pop %v1677
      %v1768 = vmul.f32 1.0, %v1767
      %v1769 = vrcp.pop %v1678
      %v1770 = vmul.f32 1.0, %v1769
      %v1771 = vrcp.pop %v1679
      %v1772 = vmul.f32 1.0, %v1771
      %v1773 = vrcp.pop %v1680
      %v1774 = vmul.f32 1.0, %v1773
      %v1775 = vrcp.pop %v1681
      %v1776 = vmul.f32 1.0, %v1775
      %v1777 = vrcp.pop %v1682
      %v1778 = vmul.f32 1.0, %v1777
      %v1779 = vrcp.pop %v1683
      %v1780 = vmul.f32 1.0, %v1779
      %v1781 = vrcp.pop %v1684
      %v1782 = vmul.f32 1.0, %v1781
      %v1783 = vpack.c.bf16 %v1688, %v1686
      %v1784 = vpack.c.bf16 %v1692, %v1690
      %v1785 = vpack.c.bf16 %v1696, %v1694
      %v1786 = vpack.c.bf16 %v1700, %v1698
      %v1787 = vpack.c.bf16 %v1704, %v1702
      %v1788 = vpack.c.bf16 %v1708, %v1706
      %v1789 = vpack.c.bf16 %v1712, %v1710
      %v1790 = vpack.c.bf16 %v1716, %v1714
      %v1791 = vpack.c.bf16 %v1720, %v1718
      %v1792 = vpack.c.bf16 %v1724, %v1722
      %v1793 = vpack.c.bf16 %v1728, %v1726
      %v1794 = vpack.c.bf16 %v1732, %v1730
      %v1795 = vpack.c.bf16 %v1736, %v1734
      %v1796 = vpack.c.bf16 %v1740, %v1738
      %v1797 = vpack.c.bf16 %v1744, %v1742
      %v1798 = vpack.c.bf16 %v1748, %v1746
      %v1799 = vpack.c.bf16 %v1752, %v1750
      %v1800 = vpack.c.bf16 %v1756, %v1754
      %v1801 = vpack.c.bf16 %v1760, %v1758
      %v1802 = vpack.c.bf16 %v1764, %v1762
      %v1803 = vpack.c.bf16 %v1768, %v1766
      %v1804 = vpack.c.bf16 %v1772, %v1770
      %v1805 = vpack.c.bf16 %v1776, %v1774
      %v1806 = vpack.c.bf16 %v1780, %v1778
      %v1807 = vpack.c.bf16 %v1782, %v1782
      %v1833 = vunpack.c.l.b16 %v1783
      %v1834 = vunpack.c.h.b16 %v1783
      %v1835 = vunpack.c.l.b16 %v1784
      %v1836 = vunpack.c.h.b16 %v1784
      %v1837 = vunpack.c.l.b16 %v1785
      %v1838 = vunpack.c.h.b16 %v1785
      %v1839 = vunpack.c.l.b16 %v1786
      %v1840 = vunpack.c.h.b16 %v1786
      %v1841 = vunpack.c.l.b16 %v1787
      %v1842 = vunpack.c.h.b16 %v1787
      %v1843 = vunpack.c.l.b16 %v1788
      %v1844 = vunpack.c.h.b16 %v1788
      %v1845 = vunpack.c.l.b16 %v1789
      %v1846 = vunpack.c.h.b16 %v1789
      %v1847 = vunpack.c.l.b16 %v1790
      %v1848 = vunpack.c.h.b16 %v1790
      %v1849 = vunpack.c.l.b16 %v1791
      %v1850 = vunpack.c.h.b16 %v1791
      %v1851 = vunpack.c.l.b16 %v1792
      %v1852 = vunpack.c.h.b16 %v1792
      %v1853 = vunpack.c.l.b16 %v1793
      %v1854 = vunpack.c.h.b16 %v1793
      %v1855 = vunpack.c.l.b16 %v1794
      %v1856 = vunpack.c.h.b16 %v1794
      %v1857 = vunpack.c.l.b16 %v1795
      %v1858 = vunpack.c.h.b16 %v1795
      %v1859 = vunpack.c.l.b16 %v1796
      %v1860 = vunpack.c.h.b16 %v1796
      %v1861 = vunpack.c.l.b16 %v1797
      %v1862 = vunpack.c.h.b16 %v1797
      %v1863 = vunpack.c.l.b16 %v1798
      %v1864 = vunpack.c.h.b16 %v1798
      %v1865 = vunpack.c.l.b16 %v1799
      %v1866 = vunpack.c.h.b16 %v1799
      %v1867 = vunpack.c.l.b16 %v1800
      %v1868 = vunpack.c.h.b16 %v1800
      %v1869 = vunpack.c.l.b16 %v1801
      %v1870 = vunpack.c.h.b16 %v1801
      %v1871 = vunpack.c.l.b16 %v1802
      %v1872 = vunpack.c.h.b16 %v1802
      %v1873 = vunpack.c.l.b16 %v1803
      %v1874 = vunpack.c.h.b16 %v1803
      %v1875 = vunpack.c.l.b16 %v1804
      %v1876 = vunpack.c.h.b16 %v1804
      %v1877 = vunpack.c.l.b16 %v1805
      %v1878 = vunpack.c.h.b16 %v1805
      %v1879 = vunpack.c.l.b16 %v1806
      %v1880 = vunpack.c.h.b16 %v1806
      %v1881 = vunpack.c.l.b16 %v1807
      %v1882 = vpack.c.b16 %v1833, %v1833
      %v1883 = vpack.c.b16 %v1834, %v1834
      %v1884 = vpack.c.b16 %v1835, %v1835
      %v1885 = vpack.c.b16 %v1836, %v1836
      %v1886 = vpack.c.b16 %v1837, %v1837
      %v1887 = vpack.c.b16 %v1838, %v1838
      %v1888 = vpack.c.b16 %v1839, %v1839
      %v1889 = vpack.c.b16 %v1840, %v1840
      %v1890 = vpack.c.b16 %v1841, %v1841
      %v1891 = vpack.c.b16 %v1842, %v1842
      %v1892 = vpack.c.b16 %v1843, %v1843
      %v1893 = vpack.c.b16 %v1844, %v1844
      %v1894 = vpack.c.b16 %v1845, %v1845
      %v1895 = vpack.c.b16 %v1846, %v1846
      %v1896 = vpack.c.b16 %v1847, %v1847
      %v1897 = vpack.c.b16 %v1848, %v1848
      %v1898 = vpack.c.b16 %v1849, %v1849
      %v1899 = vpack.c.b16 %v1850, %v1850
      %v1900 = vpack.c.b16 %v1851, %v1851
      %v1901 = vpack.c.b16 %v1852, %v1852
      %v1902 = vpack.c.b16 %v1853, %v1853
      %v1903 = vpack.c.b16 %v1854, %v1854
      %v1904 = vpack.c.b16 %v1855, %v1855
      %v1905 = vpack.c.b16 %v1856, %v1856
      %v1906 = vpack.c.b16 %v1857, %v1857
      %v1907 = vpack.c.b16 %v1858, %v1858
      %v1908 = vpack.c.b16 %v1859, %v1859
      %v1909 = vpack.c.b16 %v1860, %v1860
      %v1910 = vpack.c.b16 %v1861, %v1861
      %v1911 = vpack.c.b16 %v1862, %v1862
      %v1912 = vpack.c.b16 %v1863, %v1863
      %v1913 = vpack.c.b16 %v1864, %v1864
      %v1914 = vpack.c.b16 %v1865, %v1865
      %v1915 = vpack.c.b16 %v1866, %v1866
      %v1916 = vpack.c.b16 %v1867, %v1867
      %v1917 = vpack.c.b16 %v1868, %v1868
      %v1918 = vpack.c.b16 %v1869, %v1869
      %v1919 = vpack.c.b16 %v1870, %v1870
      %v1920 = vpack.c.b16 %v1871, %v1871
      %v1921 = vpack.c.b16 %v1872, %v1872
      %v1922 = vpack.c.b16 %v1873, %v1873
      %v1923 = vpack.c.b16 %v1874, %v1874
      %v1924 = vpack.c.b16 %v1875, %v1875
      %v1925 = vpack.c.b16 %v1876, %v1876
      %v1926 = vpack.c.b16 %v1877, %v1877
      %v1927 = vpack.c.b16 %v1878, %v1878
      %v1928 = vpack.c.b16 %v1879, %v1879
      %v1929 = vpack.c.b16 %v1880, %v1880
      %v1930 = vpack.c.b16 %v1881, %v1881
      %vm1980 = vcmask 60416
      %1981 = vst.msk [vmem:[%s280] sm:$0xf] %vm1980, %v1882
      %1982 = vst.msk [vmem:[%s280 + $0x4] sm:$0xf] %vm1980, %v1883
      %1983 = vst.msk [vmem:[%s280 + $0x8] sm:$0xf] %vm1980, %v1884
      %1984 = vst.msk [vmem:[%s280 + $0xc] sm:$0xf] %vm1980, %v1885
      %1985 = vst.msk [vmem:[%s280 + $0x10] sm:$0xf] %vm1980, %v1886
      %1986 = vst.msk [vmem:[%s280 + $0x14] sm:$0xf] %vm1980, %v1887
      %1987 = vst.msk [vmem:[%s280 + $0x18] sm:$0xf] %vm1980, %v1888
      %1988 = vst.msk [vmem:[%s280 + $0x1c] sm:$0xf] %vm1980, %v1889
      %1989 = vst.msk [vmem:[%s280 + $0x20] sm:$0xf] %vm1980, %v1890
      %1990 = vst.msk [vmem:[%s280 + $0x24] sm:$0xf] %vm1980, %v1891
      %1991 = vst.msk [vmem:[%s280 + $0x28] sm:$0xf] %vm1980, %v1892
      %1992 = vst.msk [vmem:[%s280 + $0x2c] sm:$0xf] %vm1980, %v1893
      %1993 = vst.msk [vmem:[%s280 + $0x30] sm:$0xf] %vm1980, %v1894
      %1994 = vst.msk [vmem:[%s280 + $0x34] sm:$0xf] %vm1980, %v1895
      %1995 = vst.msk [vmem:[%s280 + $0x38] sm:$0xf] %vm1980, %v1896
      %1996 = vst.msk [vmem:[%s280 + $0x3c] sm:$0xf] %vm1980, %v1897
      %1997 = vst.msk [vmem:[%s280 + $0x40] sm:$0xf] %vm1980, %v1898
      %1998 = vst.msk [vmem:[%s280 + $0x44] sm:$0xf] %vm1980, %v1899
      %1999 = vst.msk [vmem:[%s280 + $0x48] sm:$0xf] %vm1980, %v1900
      %2000 = vst.msk [vmem:[%s280 + $0x4c] sm:$0xf] %vm1980, %v1901
      %2001 = vst.msk [vmem:[%s280 + $0x50] sm:$0xf] %vm1980, %v1902
      %2002 = vst.msk [vmem:[%s280 + $0x54] sm:$0xf] %vm1980, %v1903
      %2003 = vst.msk [vmem:[%s280 + $0x58] sm:$0xf] %vm1980, %v1904
      %2004 = vst.msk [vmem:[%s280 + $0x5c] sm:$0xf] %vm1980, %v1905
      %2005 = vst.msk [vmem:[%s280 + $0x60] sm:$0xf] %vm1980, %v1906
      %2006 = vst.msk [vmem:[%s280 + $0x64] sm:$0xf] %vm1980, %v1907
      %2007 = vst.msk [vmem:[%s280 + $0x68] sm:$0xf] %vm1980, %v1908
      %2008 = vst.msk [vmem:[%s280 + $0x6c] sm:$0xf] %vm1980, %v1909
      %2009 = vst.msk [vmem:[%s280 + $0x70] sm:$0xf] %vm1980, %v1910
      %2010 = vst.msk [vmem:[%s280 + $0x74] sm:$0xf] %vm1980, %v1911
      %2011 = vst.msk [vmem:[%s280 + $0x78] sm:$0xf] %vm1980, %v1912
      %2012 = vst.msk [vmem:[%s280 + $0x7c] sm:$0xf] %vm1980, %v1913
      %2013 = vst.msk [vmem:[%s280 + $0x80] sm:$0xf] %vm1980, %v1914
      %2014 = vst.msk [vmem:[%s280 + $0x84] sm:$0xf] %vm1980, %v1915
      %2015 = vst.msk [vmem:[%s280 + $0x88] sm:$0xf] %vm1980, %v1916
      %2016 = vst.msk [vmem:[%s280 + $0x8c] sm:$0xf] %vm1980, %v1917
      %2017 = vst.msk [vmem:[%s280 + $0x90] sm:$0xf] %vm1980, %v1918
      %2018 = vst.msk [vmem:[%s280 + $0x94] sm:$0xf] %vm1980, %v1919
      %2019 = vst.msk [vmem:[%s280 + $0x98] sm:$0xf] %vm1980, %v1920
      %2020 = vst.msk [vmem:[%s280 + $0x9c] sm:$0xf] %vm1980, %v1921
      %2021 = vst.msk [vmem:[%s280 + $0xa0] sm:$0xf] %vm1980, %v1922
      %2022 = vst.msk [vmem:[%s280 + $0xa4] sm:$0xf] %vm1980, %v1923
      %2023 = vst.msk [vmem:[%s280 + $0xa8] sm:$0xf] %vm1980, %v1924
      %2024 = vst.msk [vmem:[%s280 + $0xac] sm:$0xf] %vm1980, %v1925
      %2025 = vst.msk [vmem:[%s280 + $0xb0] sm:$0xf] %vm1980, %v1926
      %2026 = vst.msk [vmem:[%s280 + $0xb4] sm:$0xf] %vm1980, %v1927
      %2027 = vst.msk [vmem:[%s280 + $0xb8] sm:$0xf] %vm1980, %v1928
      %2028 = vst.msk [vmem:[%s280 + $0xbc] sm:$0xf] %vm1980, %v1929
      %2029 = vst.msk [vmem:[%s280 + $0xc0] sm:$0xf] %vm1980, %v1930
      %s2030 = smul.u32 49, %s18
      %p2031 = scmp.lt.s32.totalorder %s2030, 97
      %s2032 = scalar_select %p2031, %s2030, 97
      %s2033 = smul.addr %s2032, 4
      %s2034 = scalar_lea.vmem %s7, %s2033
      // Predicated region
      $region49: #{tpu_custom_call.1} parent=47 // pred_check
        %p2035 = pneg %p188
      $region50: #{tpu_custom_call.1} parent=47 // pred_check_branch
        %2037 = sbr.rel (%p2035) target = $region52
      $region51: #{tpu_custom_call.1} parent=47 // pred_region
        %s2038 = smul.u32 49, %s18
      $region52: #{tpu_custom_call.1} parent=47 // pred_fallthru
        _
    $region48: #{tpu_custom_call.1} parent=5 // pred_fallthru
      _
    %p2039 = scmp.le.s32.totalorder 2, %s13
    // Predicated region
    $region53: #{tpu_custom_call.1} parent=5 // pred_check
      %p2040 = pneg %p2039
    $region54: #{tpu_custom_call.1} parent=5 // pred_check_branch
      %2042 = sbr.rel (%p2040) target = $region56
    $region55: #{tpu_custom_call.1} parent=5 // pred_region
      %s2043 = ssub.s32 %s13, 2
      // Predicated region
      $region57: #{tpu_custom_call.1} parent=55 // pred_check
        %p2044 = pneg %p194
      $region58: #{tpu_custom_call.1} parent=55 // pred_check_branch
        %2046 = sbr.rel (%p2044) target = $region60
      $region59: #{tpu_custom_call.1} parent=55 // pred_region
        %s2047 = smul.u32 49, %s19
        %p2048 = scmp.lt.s32.totalorder %s2047, 97
        %s2049 = scalar_select %p2048, %s2047, 97
        %s2050 = smul.addr %s2049, 4
        %s2051 = scalar_lea.vmem %s7, %s2050
      $region60: #{tpu_custom_call.1} parent=55 // pred_fallthru
        _
    $region56: #{tpu_custom_call.1} parent=5 // pred_fallthru
      _
  $region6: #{tpu_custom_call.1} parent=0 // loop_footer
    %s17 = sadd.s32 1, %s13
  $region7: #{tpu_custom_call.1} parent=0 // loop_footer_branch
    %12 = sbr.rel target = $region3
  $region8: #{tpu_custom_call.1} parent=0 // loop_exit
    _

</llo_original>
